<compile_context>
chip_gen: v7x
topology: tpu7x:2x2x1
jax: 0.10.0
libtpu: 0.0.40
codegen_flags: <defaults>
</compile_context>

<pallas_src>
import jax
import jax.numpy as jnp
from jax import lax
from jax.experimental import pallas as pl
from jax.experimental.pallas import tpu as pltpu


def cnn_s_kernel(flow_ref, w_ref, b_ref, o_ref, xpad_ref):
    """Fused last-timestep select + zero-pad + 3x3 single-channel conv.

    flow_ref: (bb, N, N, H)    f32 VMEM  -- raw flow_x block (all time steps).
    w_ref   : (9,)             f32 SMEM  -- row-major 3x3 conv weights.
    b_ref   : (1,)             f32 SMEM  -- conv bias.
    o_ref   : (bb, N, N)       f32 VMEM.
    xpad_ref: (bb, N+2, N+2)   f32 VMEM scratch -- padded last-step slab.
    """
    B, N, _ = o_ref.shape
    H = flow_ref.shape[-1]

    # --- stage 1: x = flow_x[..., -1], zero-padded by 1 (padding=1), fully
    # in-kernel.  The select is an iota-mask + lane reduction (standard,
    # relayout-free ops); chunking by (batch, 8 rows) bounds live vregs.
    xpad_ref[...] = jnp.zeros_like(xpad_ref)          # covers the 1-wide halo
    for b in range(B):
        for i0 in range(0, N, 8):
            rows = min(8, N - i0)
            chunk = flow_ref[b, i0:i0 + rows, :, :]                 # (rows, N, H)
            step = lax.broadcasted_iota(jnp.int32, chunk.shape, 2)
            last = jnp.sum(jnp.where(step == H - 1, chunk, 0.0), axis=-1)
            xpad_ref[b, 1 + i0:1 + i0 + rows, 1:N + 1] = last

    # --- stage 2: 3x3 conv as nine shifted VPU multiply-adds.  dj is the outer
    # loop so only two unaligned lane extracts (dj = 1, 2) hit the XLU; the di
    # taps are cheap sublane-shifted slices of the already-loaded column.
    # Weights/bias are SMEM scalars (no vector loads for a 9-element filter).
    # Deliberately NOT an im2col+MXU matmul: a K=9 / N=23 contraction would run
    # the MXU at <2% utilization and add layout work for zero benefit.
    acc = jnp.full((B, N, N), b_ref[0], dtype=jnp.float32)
    for dj in range(3):
        col = xpad_ref[:, :, dj:dj + N]                             # (B, N+2, N)
        for di in range(3):
            acc = acc + w_ref[di * 3 + dj] * col[:, di:di + N, :]
    o_ref[...] = acc


def cnn_s_forward(flow_x, w_conv, b_conv):
    """
    flow_x : (B, N, N, H)  -- data['flow_x']; only the last time step is used.
    w_conv : (1, 1, 3, 3)  -- nn.Conv2d(1, 1, 3, padding=1) weight (OIHW).
    b_conv : (1,)          -- conv bias.
    returns: (B, N, N, 1)  -- matches output.view(B, N, N, 1).
    """
    B, N, N2, H = flow_x.shape
    assert N == N2
    flow_x = flow_x.astype(jnp.float32)
    w_flat = w_conv.reshape(9).astype(jnp.float32)
    b = b_conv.reshape(1).astype(jnp.float32)

    cost = pl.CostEstimate(
        flops=18 * B * N * N,                               # 9 MACs per output
        bytes_accessed=4 * (B * N * N * H + B * N * N + 10),
        transcendentals=0,
    )
    smem = pltpu.MemorySpace.SMEM
    vmem = pltpu.MemorySpace.VMEM

    if B <= 8:
        # Tiny batch: single ungridded call — no per-grid-step overhead, no
        # redundant re-staging of the shared 9-tap filter.
        out = pl.pallas_call(
            cnn_s_kernel,
            out_shape=jax.ShapeDtypeStruct((B, N, N), jnp.float32),
            in_specs=[
                pl.BlockSpec(memory_space=vmem),    # flow_x (all time steps)
                pl.BlockSpec(memory_space=smem),    # 3x3 weights
                pl.BlockSpec(memory_space=smem),    # bias
            ],
            out_specs=pl.BlockSpec(memory_space=vmem),
            scratch_shapes=[pltpu.VMEM((B, N + 2, N + 2), jnp.float32)],
            compiler_params=pltpu.CompilerParams(
                vmem_limit_bytes=32 * 1024 * 1024),
            cost_estimate=cost,
        )(flow_x, w_flat, b)
    else:
        # Production batch: block over B so (a) resident VMEM stays bounded on
        # every generation (v7x has only 64 MiB physical), (b) v7x's two
        # TensorCores both get work via "parallel" semantics, (c) per-step vreg
        # pressure of the dj-hoisted taps stays well under the 64-vreg file.
        bb = next(d for d in (4, 2, 1) if B % d == 0)
        out = pl.pallas_call(
            cnn_s_kernel,
            out_shape=jax.ShapeDtypeStruct((B, N, N), jnp.float32),
            grid=(B // bb,),
            in_specs=[
                pl.BlockSpec((bb, N, N, H), lambda i: (i, 0, 0, 0)),
                pl.BlockSpec(memory_space=smem),
                pl.BlockSpec(memory_space=smem),
            ],
            out_specs=pl.BlockSpec((bb, N, N), lambda i: (i, 0, 0)),
            scratch_shapes=[pltpu.VMEM((bb, N + 2, N + 2), jnp.float32)],
            compiler_params=pltpu.CompilerParams(
                dimension_semantics=("parallel",),
                vmem_limit_bytes=32 * 1024 * 1024),
            cost_estimate=cost,
        )(flow_x, w_flat, b)

    return out[..., None]                                   # (B, N, N, 1)


if __name__ == "__main__":
    key = jax.random.PRNGKey(0)
    k_x, k_w, k_b, k_x2 = jax.random.split(key, 4)

    # GEANT network has 23 nodes; H = 4 history steps; tiny batch.
    B, N, H = 2, 23, 4
    flow_x = jax.random.normal(k_x, (B, N, N, H), dtype=jnp.float32)
    w_conv = jax.random.normal(k_w, (1, 1, 3, 3), dtype=jnp.float32) * 0.3
    b_conv = jax.random.normal(k_b, (1,), dtype=jnp.float32) * 0.1
    # TODO(synk): CNN_S also defines self.layer = nn.Linear(in_c, out_c) and
    # takes an `adj` argument, but forward() uses neither; not implemented.

    def torch_ref(fx):
        x4 = fx[:, :, :, -1][:, None, :, :]                 # (B, 1, N, N)
        r = lax.conv_general_dilated(
            x4, w_conv, window_strides=(1, 1), padding=((1, 1), (1, 1)),
            dimension_numbers=("NCHW", "OIHW", "NCHW"))
        r = r + b_conv[None, :, None, None]
        return r.reshape(fx.shape[0], N, N, 1)

    out = cnn_s_forward(flow_x, w_conv, b_conv)
    jax.block_until_ready(out)
    assert out.shape == (B, N, N, 1)
    assert jnp.allclose(out, torch_ref(flow_x), atol=1e-4, rtol=1e-4)

    # Also exercise the batch-blocked (gridded, megacore-parallel) path.
    B2 = 12
    flow_x2 = jax.random.normal(k_x2, (B2, N, N, H), dtype=jnp.float32)
    out2 = cnn_s_forward(flow_x2, w_conv, b_conv)
    jax.block_until_ready(out2)
    assert out2.shape == (B2, N, N, 1)
    assert jnp.allclose(out2, torch_ref(flow_x2), atol=1e-4, rtol=1e-4)

    print("KERNEL_OK")
</pallas_src>

<mosaic_0001>
module attributes {stable_mosaic.version = 11 : i64} {
  func.func @cnn_s_kernel(%arg0: memref<2x23x23x4xf32, #tpu.memory_space<vmem>>, %arg1: memref<9xf32, #tpu.memory_space<smem>>, %arg2: memref<1xf32, #tpu.memory_space<smem>>, %arg3: memref<2x23x23xf32, #tpu.memory_space<vmem>>, %arg4: memref<2x25x25xf32, #tpu.memory_space<vmem>>) attributes {dimension_semantics = [], scalar_prefetch = 0 : i64, scratch_operands = 1 : i64, tpu.core_type = #tpu.core_type<tc>} {
    %cst = arith.constant 0.000000e+00 : f32
    %0 = vector.broadcast %cst : f32 to vector<2x25x25xf32>
    %c0 = arith.constant 0 : index
    %c0_0 = arith.constant 0 : index
    %c0_1 = arith.constant 0 : index
    %1 = vector.load %arg4[%c0, %c0_0, %c0_1] : memref<2x25x25xf32, #tpu.memory_space<vmem>>, vector<2x25x25xf32>
    tpu.vector_store %arg4[%c0, %c0_0, %c0_1], %0 {strides = array<i32>} : memref<2x25x25xf32, #tpu.memory_space<vmem>>, vector<2x25x25xf32>,
    %c0_2 = arith.constant 0 : index
    %c0_3 = arith.constant 0 : index
    %c0_4 = arith.constant 0 : index
    %c0_5 = arith.constant 0 : index
    %2 = vector.load %arg0[%c0_2, %c0_3, %c0_4, %c0_5] : memref<2x23x23x4xf32, #tpu.memory_space<vmem>>, vector<1x8x23x4xf32>
    %3 = vector.shape_cast %2 : vector<1x8x23x4xf32> to vector<8x23x4xf32>
    %4 = tpu.iota {dimensions = array<i32: 2>} : vector<8x23x4xi32>
    %c3_i32 = arith.constant 3 : i32
    %5 = vector.broadcast %c3_i32 : i32 to vector<8x23x4xi32>
    %6 = arith.cmpi eq, %4, %5 : vector<8x23x4xi32>
    %cst_6 = arith.constant 0.000000e+00 : f32
    %7 = vector.broadcast %cst_6 : f32 to vector<8x23x4xf32>
    %8 = arith.select %6, %3, %7 : vector<8x23x4xi1>, vector<8x23x4xf32>
    %cst_7 = arith.constant dense<0.000000e+00> : vector<8x23xf32>
    %9 = vector.multi_reduction <add>, %8, %cst_7 [2] : vector<8x23x4xf32> to vector<8x23xf32>
    %c0_8 = arith.constant 0 : index
    %c1 = arith.constant 1 : index
    %c1_9 = arith.constant 1 : index
    %10 = vector.load %arg4[%c0_8, %c1, %c1_9] : memref<2x25x25xf32, #tpu.memory_space<vmem>>, vector<1x8x23xf32>
    %11 = vector.shape_cast %10 : vector<1x8x23xf32> to vector<8x23xf32>
    %12 = vector.shape_cast %9 : vector<8x23xf32> to vector<1x8x23xf32>
    tpu.vector_store %arg4[%c0_8, %c1, %c1_9], %12 {strides = array<i32>} : memref<2x25x25xf32, #tpu.memory_space<vmem>>, vector<1x8x23xf32>,
    %c0_10 = arith.constant 0 : index
    %c8 = arith.constant 8 : index
    %c0_11 = arith.constant 0 : index
    %c0_12 = arith.constant 0 : index
    %13 = vector.load %arg0[%c0_10, %c8, %c0_11, %c0_12] : memref<2x23x23x4xf32, #tpu.memory_space<vmem>>, vector<1x8x23x4xf32>
    %14 = vector.shape_cast %13 : vector<1x8x23x4xf32> to vector<8x23x4xf32>
    %15 = tpu.iota {dimensions = array<i32: 2>} : vector<8x23x4xi32>
    %c3_i32_13 = arith.constant 3 : i32
    %16 = vector.broadcast %c3_i32_13 : i32 to vector<8x23x4xi32>
    %17 = arith.cmpi eq, %15, %16 : vector<8x23x4xi32>
    %cst_14 = arith.constant 0.000000e+00 : f32
    %18 = vector.broadcast %cst_14 : f32 to vector<8x23x4xf32>
    %19 = arith.select %17, %14, %18 : vector<8x23x4xi1>, vector<8x23x4xf32>
    %cst_15 = arith.constant dense<0.000000e+00> : vector<8x23xf32>
    %20 = vector.multi_reduction <add>, %19, %cst_15 [2] : vector<8x23x4xf32> to vector<8x23xf32>
    %c0_16 = arith.constant 0 : index
    %c9 = arith.constant 9 : index
    %c1_17 = arith.constant 1 : index
    %21 = vector.load %arg4[%c0_16, %c9, %c1_17] : memref<2x25x25xf32, #tpu.memory_space<vmem>>, vector<1x8x23xf32>
    %22 = vector.shape_cast %21 : vector<1x8x23xf32> to vector<8x23xf32>
    %23 = vector.shape_cast %20 : vector<8x23xf32> to vector<1x8x23xf32>
    tpu.vector_store %arg4[%c0_16, %c9, %c1_17], %23 {strides = array<i32>} : memref<2x25x25xf32, #tpu.memory_space<vmem>>, vector<1x8x23xf32>,
    %c0_18 = arith.constant 0 : index
    %c16 = arith.constant 16 : index
    %c0_19 = arith.constant 0 : index
    %c0_20 = arith.constant 0 : index
    %24 = vector.load %arg0[%c0_18, %c16, %c0_19, %c0_20] : memref<2x23x23x4xf32, #tpu.memory_space<vmem>>, vector<1x7x23x4xf32>
    %25 = vector.shape_cast %24 : vector<1x7x23x4xf32> to vector<7x23x4xf32>
    %26 = tpu.iota {dimensions = array<i32: 2>} : vector<7x23x4xi32>
    %c3_i32_21 = arith.constant 3 : i32
    %27 = vector.broadcast %c3_i32_21 : i32 to vector<7x23x4xi32>
    %28 = arith.cmpi eq, %26, %27 : vector<7x23x4xi32>
    %cst_22 = arith.constant 0.000000e+00 : f32
    %29 = vector.broadcast %cst_22 : f32 to vector<7x23x4xf32>
    %30 = arith.select %28, %25, %29 : vector<7x23x4xi1>, vector<7x23x4xf32>
    %cst_23 = arith.constant dense<0.000000e+00> : vector<7x23xf32>
    %31 = vector.multi_reduction <add>, %30, %cst_23 [2] : vector<7x23x4xf32> to vector<7x23xf32>
    %c0_24 = arith.constant 0 : index
    %c17 = arith.constant 17 : index
    %c1_25 = arith.constant 1 : index
    %32 = vector.load %arg4[%c0_24, %c17, %c1_25] : memref<2x25x25xf32, #tpu.memory_space<vmem>>, vector<1x7x23xf32>
    %33 = vector.shape_cast %32 : vector<1x7x23xf32> to vector<7x23xf32>
    %34 = vector.shape_cast %31 : vector<7x23xf32> to vector<1x7x23xf32>
    tpu.vector_store %arg4[%c0_24, %c17, %c1_25], %34 {strides = array<i32>} : memref<2x25x25xf32, #tpu.memory_space<vmem>>, vector<1x7x23xf32>,
    %c1_26 = arith.constant 1 : index
    %c0_27 = arith.constant 0 : index
    %c0_28 = arith.constant 0 : index
    %c0_29 = arith.constant 0 : index
    %35 = vector.load %arg0[%c1_26, %c0_27, %c0_28, %c0_29] : memref<2x23x23x4xf32, #tpu.memory_space<vmem>>, vector<1x8x23x4xf32>
    %36 = vector.shape_cast %35 : vector<1x8x23x4xf32> to vector<8x23x4xf32>
    %37 = tpu.iota {dimensions = array<i32: 2>} : vector<8x23x4xi32>
    %c3_i32_30 = arith.constant 3 : i32
    %38 = vector.broadcast %c3_i32_30 : i32 to vector<8x23x4xi32>
    %39 = arith.cmpi eq, %37, %38 : vector<8x23x4xi32>
    %cst_31 = arith.constant 0.000000e+00 : f32
    %40 = vector.broadcast %cst_31 : f32 to vector<8x23x4xf32>
    %41 = arith.select %39, %36, %40 : vector<8x23x4xi1>, vector<8x23x4xf32>
    %cst_32 = arith.constant dense<0.000000e+00> : vector<8x23xf32>
    %42 = vector.multi_reduction <add>, %41, %cst_32 [2] : vector<8x23x4xf32> to vector<8x23xf32>
    %c1_33 = arith.constant 1 : index
    %c1_34 = arith.constant 1 : index
    %c1_35 = arith.constant 1 : index
    %43 = vector.load %arg4[%c1_33, %c1_34, %c1_35] : memref<2x25x25xf32, #tpu.memory_space<vmem>>, vector<1x8x23xf32>
    %44 = vector.shape_cast %43 : vector<1x8x23xf32> to vector<8x23xf32>
    %45 = vector.shape_cast %42 : vector<8x23xf32> to vector<1x8x23xf32>
    tpu.vector_store %arg4[%c1_33, %c1_34, %c1_35], %45 {strides = array<i32>} : memref<2x25x25xf32, #tpu.memory_space<vmem>>, vector<1x8x23xf32>,
    %c1_36 = arith.constant 1 : index
    %c8_37 = arith.constant 8 : index
    %c0_38 = arith.constant 0 : index
    %c0_39 = arith.constant 0 : index
    %46 = vector.load %arg0[%c1_36, %c8_37, %c0_38, %c0_39] : memref<2x23x23x4xf32, #tpu.memory_space<vmem>>, vector<1x8x23x4xf32>
    %47 = vector.shape_cast %46 : vector<1x8x23x4xf32> to vector<8x23x4xf32>
    %48 = tpu.iota {dimensions = array<i32: 2>} : vector<8x23x4xi32>
    %c3_i32_40 = arith.constant 3 : i32
    %49 = vector.broadcast %c3_i32_40 : i32 to vector<8x23x4xi32>
    %50 = arith.cmpi eq, %48, %49 : vector<8x23x4xi32>
    %cst_41 = arith.constant 0.000000e+00 : f32
    %51 = vector.broadcast %cst_41 : f32 to vector<8x23x4xf32>
    %52 = arith.select %50, %47, %51 : vector<8x23x4xi1>, vector<8x23x4xf32>
    %cst_42 = arith.constant dense<0.000000e+00> : vector<8x23xf32>
    %53 = vector.multi_reduction <add>, %52, %cst_42 [2] : vector<8x23x4xf32> to vector<8x23xf32>
    %c1_43 = arith.constant 1 : index
    %c9_44 = arith.constant 9 : index
    %c1_45 = arith.constant 1 : index
    %54 = vector.load %arg4[%c1_43, %c9_44, %c1_45] : memref<2x25x25xf32, #tpu.memory_space<vmem>>, vector<1x8x23xf32>
    %55 = vector.shape_cast %54 : vector<1x8x23xf32> to vector<8x23xf32>
    %56 = vector.shape_cast %53 : vector<8x23xf32> to vector<1x8x23xf32>
    tpu.vector_store %arg4[%c1_43, %c9_44, %c1_45], %56 {strides = array<i32>} : memref<2x25x25xf32, #tpu.memory_space<vmem>>, vector<1x8x23xf32>,
    %c1_46 = arith.constant 1 : index
    %c16_47 = arith.constant 16 : index
    %c0_48 = arith.constant 0 : index
    %c0_49 = arith.constant 0 : index
    %57 = vector.load %arg0[%c1_46, %c16_47, %c0_48, %c0_49] : memref<2x23x23x4xf32, #tpu.memory_space<vmem>>, vector<1x7x23x4xf32>
    %58 = vector.shape_cast %57 : vector<1x7x23x4xf32> to vector<7x23x4xf32>
    %59 = tpu.iota {dimensions = array<i32: 2>} : vector<7x23x4xi32>
    %c3_i32_50 = arith.constant 3 : i32
    %60 = vector.broadcast %c3_i32_50 : i32 to vector<7x23x4xi32>
    %61 = arith.cmpi eq, %59, %60 : vector<7x23x4xi32>
    %cst_51 = arith.constant 0.000000e+00 : f32
    %62 = vector.broadcast %cst_51 : f32 to vector<7x23x4xf32>
    %63 = arith.select %61, %58, %62 : vector<7x23x4xi1>, vector<7x23x4xf32>
    %cst_52 = arith.constant dense<0.000000e+00> : vector<7x23xf32>
    %64 = vector.multi_reduction <add>, %63, %cst_52 [2] : vector<7x23x4xf32> to vector<7x23xf32>
    %c1_53 = arith.constant 1 : index
    %c17_54 = arith.constant 17 : index
    %c1_55 = arith.constant 1 : index
    %65 = vector.load %arg4[%c1_53, %c17_54, %c1_55] : memref<2x25x25xf32, #tpu.memory_space<vmem>>, vector<1x7x23xf32>
    %66 = vector.shape_cast %65 : vector<1x7x23xf32> to vector<7x23xf32>
    %67 = vector.shape_cast %64 : vector<7x23xf32> to vector<1x7x23xf32>
    tpu.vector_store %arg4[%c1_53, %c17_54, %c1_55], %67 {strides = array<i32>} : memref<2x25x25xf32, #tpu.memory_space<vmem>>, vector<1x7x23xf32>,
    %c0_56 = arith.constant 0 : index
    %68 = memref.load %arg2[%c0_56] : memref<1xf32, #tpu.memory_space<smem>>
    %69 = vector.broadcast %68 : f32 to vector<2x23x23xf32>
    %c0_57 = arith.constant 0 : index
    %c0_58 = arith.constant 0 : index
    %c0_59 = arith.constant 0 : index
    %70 = vector.load %arg4[%c0_57, %c0_58, %c0_59] : memref<2x25x25xf32, #tpu.memory_space<vmem>>, vector<2x25x23xf32>
    %c0_60 = arith.constant 0 : index
    %71 = memref.load %arg1[%c0_60] : memref<9xf32, #tpu.memory_space<smem>>
    %72 = vector.extract_strided_slice %70 {offsets = [0, 0, 0], sizes = [2, 23, 23], strides = [1, 1, 1]} : vector<2x25x23xf32> to vector<2x23x23xf32>
    %73 = vector.broadcast %71 : f32 to vector<2x23x23xf32>
    %74 = arith.mulf %73, %72 : vector<2x23x23xf32>
    %75 = arith.addf %69, %74 : vector<2x23x23xf32>
    %c3 = arith.constant 3 : index
    %76 = memref.load %arg1[%c3] : memref<9xf32, #tpu.memory_space<smem>>
    %77 = vector.extract_strided_slice %70 {offsets = [0, 1, 0], sizes = [2, 23, 23], strides = [1, 1, 1]} : vector<2x25x23xf32> to vector<2x23x23xf32>
    %78 = vector.broadcast %76 : f32 to vector<2x23x23xf32>
    %79 = arith.mulf %78, %77 : vector<2x23x23xf32>
    %80 = arith.addf %75, %79 : vector<2x23x23xf32>
    %c6 = arith.constant 6 : index
    %81 = memref.load %arg1[%c6] : memref<9xf32, #tpu.memory_space<smem>>
    %82 = vector.extract_strided_slice %70 {offsets = [0, 2, 0], sizes = [2, 23, 23], strides = [1, 1, 1]} : vector<2x25x23xf32> to vector<2x23x23xf32>
    %83 = vector.broadcast %81 : f32 to vector<2x23x23xf32>
    %84 = arith.mulf %83, %82 : vector<2x23x23xf32>
    %85 = arith.addf %80, %84 : vector<2x23x23xf32>
    %c0_61 = arith.constant 0 : index
    %c0_62 = arith.constant 0 : index
    %c1_63 = arith.constant 1 : index
    %86 = vector.load %arg4[%c0_61, %c0_62, %c1_63] : memref<2x25x25xf32, #tpu.memory_space<vmem>>, vector<2x25x23xf32>
    %c1_64 = arith.constant 1 : index
    %87 = memref.load %arg1[%c1_64] : memref<9xf32, #tpu.memory_space<smem>>
    %88 = vector.extract_strided_slice %86 {offsets = [0, 0, 0], sizes = [2, 23, 23], strides = [1, 1, 1]} : vector<2x25x23xf32> to vector<2x23x23xf32>
    %89 = vector.broadcast %87 : f32 to vector<2x23x23xf32>
    %90 = arith.mulf %89, %88 : vector<2x23x23xf32>
    %91 = arith.addf %85, %90 : vector<2x23x23xf32>
    %c4 = arith.constant 4 : index
    %92 = memref.load %arg1[%c4] : memref<9xf32, #tpu.memory_space<smem>>
    %93 = vector.extract_strided_slice %86 {offsets = [0, 1, 0], sizes = [2, 23, 23], strides = [1, 1, 1]} : vector<2x25x23xf32> to vector<2x23x23xf32>
    %94 = vector.broadcast %92 : f32 to vector<2x23x23xf32>
    %95 = arith.mulf %94, %93 : vector<2x23x23xf32>
    %96 = arith.addf %91, %95 : vector<2x23x23xf32>
    %c7 = arith.constant 7 : index
    %97 = memref.load %arg1[%c7] : memref<9xf32, #tpu.memory_space<smem>>
    %98 = vector.extract_strided_slice %86 {offsets = [0, 2, 0], sizes = [2, 23, 23], strides = [1, 1, 1]} : vector<2x25x23xf32> to vector<2x23x23xf32>
    %99 = vector.broadcast %97 : f32 to vector<2x23x23xf32>
    %100 = arith.mulf %99, %98 : vector<2x23x23xf32>
    %101 = arith.addf %96, %100 : vector<2x23x23xf32>
    %c0_65 = arith.constant 0 : index
    %c0_66 = arith.constant 0 : index
    %c2 = arith.constant 2 : index
    %102 = vector.load %arg4[%c0_65, %c0_66, %c2] : memref<2x25x25xf32, #tpu.memory_space<vmem>>, vector<2x25x23xf32>
    %c2_67 = arith.constant 2 : index
    %103 = memref.load %arg1[%c2_67] : memref<9xf32, #tpu.memory_space<smem>>
    %104 = vector.extract_strided_slice %102 {offsets = [0, 0, 0], sizes = [2, 23, 23], strides = [1, 1, 1]} : vector<2x25x23xf32> to vector<2x23x23xf32>
    %105 = vector.broadcast %103 : f32 to vector<2x23x23xf32>
    %106 = arith.mulf %105, %104 : vector<2x23x23xf32>
    %107 = arith.addf %101, %106 : vector<2x23x23xf32>
    %c5 = arith.constant 5 : index
    %108 = memref.load %arg1[%c5] : memref<9xf32, #tpu.memory_space<smem>>
    %109 = vector.extract_strided_slice %102 {offsets = [0, 1, 0], sizes = [2, 23, 23], strides = [1, 1, 1]} : vector<2x25x23xf32> to vector<2x23x23xf32>
    %110 = vector.broadcast %108 : f32 to vector<2x23x23xf32>
    %111 = arith.mulf %110, %109 : vector<2x23x23xf32>
    %112 = arith.addf %107, %111 : vector<2x23x23xf32>
    %c8_68 = arith.constant 8 : index
    %113 = memref.load %arg1[%c8_68] : memref<9xf32, #tpu.memory_space<smem>>
    %114 = vector.extract_strided_slice %102 {offsets = [0, 2, 0], sizes = [2, 23, 23], strides = [1, 1, 1]} : vector<2x25x23xf32> to vector<2x23x23xf32>
    %115 = vector.broadcast %113 : f32 to vector<2x23x23xf32>
    %116 = arith.mulf %115, %114 : vector<2x23x23xf32>
    %117 = arith.addf %112, %116 : vector<2x23x23xf32>
    %c0_69 = arith.constant 0 : index
    %c0_70 = arith.constant 0 : index
    %c0_71 = arith.constant 0 : index
    %118 = vector.load %arg3[%c0_69, %c0_70, %c0_71] : memref<2x23x23xf32, #tpu.memory_space<vmem>>, vector<2x23x23xf32>
    tpu.vector_store %arg3[%c0_69, %c0_70, %c0_71], %117 {strides = array<i32>} : memref<2x23x23xf32, #tpu.memory_space<vmem>>, vector<2x23x23xf32>,
    return
  }
}

</mosaic_0001>

<llo_original>
// kernel: tpu_custom_call.1
$region0: #{tpu_custom_call.1}
  #allocation0 [shape = 'u32[]', space=smem, size = 0x4, offset = 0x4, fixed_abs, tag = 'smem constant byte address 0x4 - core index']
  #allocation1 [shape = 'u32[144,128]{1,0:T(1,128)}', space=vmem, size = 0x12000, scoped, tag = 'internal scratch']
  #allocation2 [shape = 'f32[2,25,25]{2,1,0:T(8,128)}', space=vmem, size = 0x8000, scoped, tag = 'scratch operand']
  #allocation3 [shape = 'f32[1]{0:T(128)S(6)}', space=smem, size = 0x200, scoped, tag = 'scoped memory for tpu_custom_call.1']
  %s0 = inlined_call_operand.vmem [shape: f32[2,23,23,4], index: 0, kind: input, shape index: {}]
  %s1 = inlined_call_operand.vmem [shape: f32[9], index: 1, kind: input, shape index: {}]
  %s2 = inlined_call_operand.<no memory space> [shape: f32[1], index: 2, kind: input, shape index: {}]
  %s3 = inlined_call_operand.vmem [shape: f32[2,23,23], index: 3, kind: output, shape index: {}]
  %s4 = sld [smem:[#allocation0]]
  $region26: #{tpu_custom_call.1} parent=0
    _
  %s6 = ssub.s32 1, %s4
  %s7 = scalar_select 0, %s6, %s4
  %8 = sst [smem:[#allocation3]] %s2
  $region1: #{tpu_custom_call.1} parent=0
    #allocation4 [shape = 'u8[512]{0}', space=smem, size = 0x200, scoped, tag = 'input window, operand 1, single buffered']
    #allocation5 [shape = 's32[1]{0}', space=sflag, size = 0x4, scoped, tag = 'scoped memory for tpu_custom_call.1']
    %9 = vsyncpa [#allocation5], 0
    // Predicated region
    $region2: #{tpu_custom_call.1} parent=1 // pred_check
      _
    $region3: #{tpu_custom_call.1} parent=1 // pred_check_branch
      %11 = sbr.rel (0) target = $region5
    $region4: #{tpu_custom_call.1} parent=1 // pred_region
      _
    $region5: #{tpu_custom_call.1} parent=1 // pred_fallthru
      _
    // Predicated region
    $region6: #{tpu_custom_call.1} parent=1 // pred_check
      _
    $region7: #{tpu_custom_call.1} parent=1 // pred_check_branch
      %13 = sbr.rel (0) target = $region9
    $region8: #{tpu_custom_call.1} parent=1 // pred_region
      %s15 = ssub.s32 16, 16
      %16 = vsyncadd [#allocation5], %s15
      %s18 = sshll.u32 %s1, 4
      %s19 = int_to_ptr.vmem [resolvable:$true] %s18
      %21 = dma.vmem_to_smem %s19, 16, [#allocation4], [#allocation5]
    $region9: #{tpu_custom_call.1} parent=1 // pred_fallthru
      _
    // Predicated region
    $region10: #{tpu_custom_call.1} parent=1 // pred_check
      _
    $region11: #{tpu_custom_call.1} parent=1 // pred_check_branch
      %23 = sbr.rel (0) target = $region13
    $region12: #{tpu_custom_call.1} parent=1 // pred_region
      _
    $region13: #{tpu_custom_call.1} parent=1 // pred_fallthru
      _
    // Predicated region
    $region14: #{tpu_custom_call.1} parent=1 // pred_check
      _
    $region15: #{tpu_custom_call.1} parent=1 // pred_check_branch
      %25 = sbr.rel (0) target = $region17
    $region16: #{tpu_custom_call.1} parent=1 // pred_region
      %26 = dma.done [#allocation5], 16
    $region17: #{tpu_custom_call.1} parent=1 // pred_fallthru
      _
    %27 = sfence
    %vm28 = vcmask 203776
    %29 = vst.msk [vmem:[#allocation2] sm:$0xff] %vm28, 0.0
    %30 = vst.msk [vmem:[#allocation2 + $0x8] sm:$0xff] %vm28, 0.0
    %31 = vst.msk [vmem:[#allocation2 + $0x10] sm:$0xff] %vm28, 0.0
    %vm32 = vcmask 196608
    %33 = vst.msk [vmem:[#allocation2 + $0x18] sm:$0x1] %vm32, 0.0
    %34 = vst.msk [vmem:[#allocation2 + $0x20] sm:$0xff] %vm28, 0.0
    %35 = vst.msk [vmem:[#allocation2 + $0x28] sm:$0xff] %vm28, 0.0
    %36 = vst.msk [vmem:[#allocation2 + $0x30] sm:$0xff] %vm28, 0.0
    %37 = vst.msk [vmem:[#allocation2 + $0x38] sm:$0x1] %vm32, 0.0
    %v38 = vld [vmem:[%s0] sm:$0xff]
    %v39 = vld [vmem:[%s0 + $0x8] sm:$0xff]
    %v40 = vld [vmem:[%s0 + $0x10] sm:$0x7f]
    %v41 = vld [vmem:[%s0 + $0x18] sm:$0xff]
    %v42 = vld [vmem:[%s0 + $0x20] sm:$0xff]
    %v43 = vld [vmem:[%s0 + $0x28] sm:$0x7f]
    %v44 = vld [vmem:[%s0 + $0x30] sm:$0xff]
    %v45 = vld [vmem:[%s0 + $0x38] sm:$0xff]
    %v46 = vld [vmem:[%s0 + $0x40] sm:$0x7f]
    %v47 = vld [vmem:[%s0 + $0x48] sm:$0xff]
    %v48 = vld [vmem:[%s0 + $0x50] sm:$0xff]
    %v49 = vld [vmem:[%s0 + $0x58] sm:$0x7f]
    %v50 = vld [vmem:[%s0 + $0x60] sm:$0xff]
    %v51 = vld [vmem:[%s0 + $0x68] sm:$0xff]
    %v52 = vld [vmem:[%s0 + $0x70] sm:$0x7f]
    %v53 = vld [vmem:[%s0 + $0x78] sm:$0xff]
    %v54 = vld [vmem:[%s0 + $0x80] sm:$0xff]
    %v55 = vld [vmem:[%s0 + $0x88] sm:$0x7f]
    %v56 = vld [vmem:[%s0 + $0x90] sm:$0xff]
    %v57 = vld [vmem:[%s0 + $0x98] sm:$0xff]
    %v58 = vld [vmem:[%s0 + $0xa0] sm:$0x7f]
    %v59 = vld [vmem:[%s0 + $0xa8] sm:$0xff]
    %v60 = vld [vmem:[%s0 + $0xb0] sm:$0xff]
    %v61 = vld [vmem:[%s0 + $0xb8] sm:$0x7f]
    %v62 = vlaneseq
    %v63 = vand.u32 %v62, 127
    %vm64 = vcmp.eq.s32.totalorder %v63, 3
    %v65 = vsel %vm64, %v38, 0.0
    %v66 = vsel %vm64, %v39, 0.0
    %v67 = vsel %vm64, %v40, 0.0
    %v68 = vsel %vm64, %v41, 0.0
    %v69 = vsel %vm64, %v42, 0.0
    %v70 = vsel %vm64, %v43, 0.0
    %v71 = vsel %vm64, %v44, 0.0
    %v72 = vsel %vm64, %v45, 0.0
    %v73 = vsel %vm64, %v46, 0.0
    %v74 = vsel %vm64, %v47, 0.0
    %v75 = vsel %vm64, %v48, 0.0
    %v76 = vsel %vm64, %v49, 0.0
    %v77 = vsel %vm64, %v50, 0.0
    %v78 = vsel %vm64, %v51, 0.0
    %v79 = vsel %vm64, %v52, 0.0
    %v80 = vsel %vm64, %v53, 0.0
    %v81 = vsel %vm64, %v54, 0.0
    %v82 = vsel %vm64, %v55, 0.0
    %v83 = vsel %vm64, %v56, 0.0
    %v84 = vsel %vm64, %v57, 0.0
    %v85 = vsel %vm64, %v58, 0.0
    %v86 = vsel %vm64, %v59, 0.0
    %v87 = vsel %vm64, %v60, 0.0
    %v88 = vsel %vm64, %v61, 0.0
    %vm89 = vcmask 31744
    %v90 = vsel %vm89, %v65, 0.0
    %91 = vadd.xlane.f32.xlu0 %v90
    %v92 = vpop.xlane.xlu0 %91
    %v93 = vsel %vm89, %v66, 0.0
    %94 = vadd.xlane.f32.xlu0 %v93
    %v95 = vpop.xlane.xlu0 %94
    %vm96 = vcmask 30720
    %v97 = vsel %vm96, %v67, 0.0
    %98 = vadd.xlane.f32.xlu0 %v97
    %v99 = vpop.xlane.xlu0 %98
    %v100 = vsel %vm89, %v68, 0.0
    %101 = vadd.xlane.f32.xlu0 %v100
    %v102 = vpop.xlane.xlu0 %101
    %v103 = vsel %vm89, %v69, 0.0
    %104 = vadd.xlane.f32.xlu0 %v103
    %v105 = vpop.xlane.xlu0 %104
    %v106 = vsel %vm96, %v70, 0.0
    %107 = vadd.xlane.f32.xlu0 %v106
    %v108 = vpop.xlane.xlu0 %107
    %v109 = vsel %vm89, %v71, 0.0
    %110 = vadd.xlane.f32.xlu0 %v109
    %v111 = vpop.xlane.xlu0 %110
    %v112 = vsel %vm89, %v72, 0.0
    %113 = vadd.xlane.f32.xlu0 %v112
    %v114 = vpop.xlane.xlu0 %113
    %v115 = vsel %vm96, %v73, 0.0
    %116 = vadd.xlane.f32.xlu0 %v115
    %v117 = vpop.xlane.xlu0 %116
    %v118 = vsel %vm89, %v74, 0.0
    %119 = vadd.xlane.f32.xlu0 %v118
    %v120 = vpop.xlane.xlu0 %119
    %v121 = vsel %vm89, %v75, 0.0
    %122 = vadd.xlane.f32.xlu0 %v121
    %v123 = vpop.xlane.xlu0 %122
    %v124 = vsel %vm96, %v76, 0.0
    %125 = vadd.xlane.f32.xlu0 %v124
    %v126 = vpop.xlane.xlu0 %125
    %v127 = vsel %vm89, %v77, 0.0
    %128 = vadd.xlane.f32.xlu0 %v127
    %v129 = vpop.xlane.xlu0 %128
    %v130 = vsel %vm89, %v78, 0.0
    %131 = vadd.xlane.f32.xlu0 %v130
    %v132 = vpop.xlane.xlu0 %131
    %v133 = vsel %vm96, %v79, 0.0
    %134 = vadd.xlane.f32.xlu0 %v133
    %v135 = vpop.xlane.xlu0 %134
    %v136 = vsel %vm89, %v80, 0.0
    %137 = vadd.xlane.f32.xlu0 %v136
    %v138 = vpop.xlane.xlu0 %137
    %v139 = vsel %vm89, %v81, 0.0
    %140 = vadd.xlane.f32.xlu0 %v139
    %v141 = vpop.xlane.xlu0 %140
    %v142 = vsel %vm96, %v82, 0.0
    %143 = vadd.xlane.f32.xlu0 %v142
    %v144 = vpop.xlane.xlu0 %143
    %v145 = vsel %vm89, %v83, 0.0
    %146 = vadd.xlane.f32.xlu0 %v145
    %v147 = vpop.xlane.xlu0 %146
    %v148 = vsel %vm89, %v84, 0.0
    %149 = vadd.xlane.f32.xlu0 %v148
    %v150 = vpop.xlane.xlu0 %149
    %v151 = vsel %vm96, %v85, 0.0
    %152 = vadd.xlane.f32.xlu0 %v151
    %v153 = vpop.xlane.xlu0 %152
    %v154 = vsel %vm89, %v86, 0.0
    %155 = vadd.xlane.f32.xlu0 %v154
    %v156 = vpop.xlane.xlu0 %155
    %v157 = vsel %vm89, %v87, 0.0
    %158 = vadd.xlane.f32.xlu0 %v157
    %v159 = vpop.xlane.xlu0 %158
    %v160 = vsel %vm96, %v88, 0.0
    %161 = vadd.xlane.f32.xlu0 %v160
    %v162 = vpop.xlane.xlu0 %161
    %v187 = vadd.s32 %v63, 4294967295
    %v188 = vlaneseq
    %v189 = vshrl.u32 %v188, 7
    %v190 = vsub.s32 %v187, %v189
    %v191 = vrot.slane %v92, %v190
    %v192 = vadd.s32 %v63, 4294967287
    %v193 = vlaneseq
    %v194 = vshrl.u32 %v193, 7
    %v195 = vsub.s32 %v192, %v194
    %v196 = vrot.slane %v95, %v195
    %vm197 = vcmask 138312
    %v198 = vsel %vm197, %v196, %v191
    %v199 = vadd.s32 %v63, 4294967279
    %v200 = vlaneseq
    %v201 = vshrl.u32 %v200, 7
    %v202 = vsub.s32 %v199, %v201
    %v203 = vrot.slane %v99, %v202
    %vm204 = vcmask 203912
    %v205 = vsel %vm204, %v203, %v198
    %v206 = vlaneseq
    %v207 = vshrl.u32 %v206, 7
    %v208 = vsub.s32 %v187, %v207
    %v209 = vrot.slane %v102, %v208
    %v210 = vlaneseq
    %v211 = vshrl.u32 %v210, 7
    %v212 = vsub.s32 %v192, %v211
    %v213 = vrot.slane %v105, %v212
    %v214 = vsel %vm197, %v213, %v209
    %v215 = vlaneseq
    %v216 = vshrl.u32 %v215, 7
    %v217 = vsub.s32 %v199, %v216
    %v218 = vrot.slane %v108, %v217
    %v219 = vsel %vm204, %v218, %v214
    %v220 = vlaneseq
    %v221 = vshrl.u32 %v220, 7
    %v222 = vsub.s32 %v187, %v221
    %v223 = vrot.slane %v111, %v222
    %v224 = vlaneseq
    %v225 = vshrl.u32 %v224, 7
    %v226 = vsub.s32 %v192, %v225
    %v227 = vrot.slane %v114, %v226
    %v228 = vsel %vm197, %v227, %v223
    %v229 = vlaneseq
    %v230 = vshrl.u32 %v229, 7
    %v231 = vsub.s32 %v199, %v230
    %v232 = vrot.slane %v117, %v231
    %v233 = vsel %vm204, %v232, %v228
    %v234 = vlaneseq
    %v235 = vshrl.u32 %v234, 7
    %v236 = vsub.s32 %v187, %v235
    %v237 = vrot.slane %v120, %v236
    %v238 = vlaneseq
    %v239 = vshrl.u32 %v238, 7
    %v240 = vsub.s32 %v192, %v239
    %v241 = vrot.slane %v123, %v240
    %v242 = vsel %vm197, %v241, %v237
    %v243 = vlaneseq
    %v244 = vshrl.u32 %v243, 7
    %v245 = vsub.s32 %v199, %v244
    %v246 = vrot.slane %v126, %v245
    %v247 = vsel %vm204, %v246, %v242
    %v248 = vlaneseq
    %v249 = vshrl.u32 %v248, 7
    %v250 = vsub.s32 %v187, %v249
    %v251 = vrot.slane %v129, %v250
    %v252 = vlaneseq
    %v253 = vshrl.u32 %v252, 7
    %v254 = vsub.s32 %v192, %v253
    %v255 = vrot.slane %v132, %v254
    %v256 = vsel %vm197, %v255, %v251
    %v257 = vlaneseq
    %v258 = vshrl.u32 %v257, 7
    %v259 = vsub.s32 %v199, %v258
    %v260 = vrot.slane %v135, %v259
    %v261 = vsel %vm204, %v260, %v256
    %v262 = vlaneseq
    %v263 = vshrl.u32 %v262, 7
    %v264 = vsub.s32 %v187, %v263
    %v265 = vrot.slane %v138, %v264
    %v266 = vlaneseq
    %v267 = vshrl.u32 %v266, 7
    %v268 = vsub.s32 %v192, %v267
    %v269 = vrot.slane %v141, %v268
    %v270 = vsel %vm197, %v269, %v265
    %v271 = vlaneseq
    %v272 = vshrl.u32 %v271, 7
    %v273 = vsub.s32 %v199, %v272
    %v274 = vrot.slane %v144, %v273
    %v275 = vsel %vm204, %v274, %v270
    %v276 = vlaneseq
    %v277 = vshrl.u32 %v276, 7
    %v278 = vsub.s32 %v187, %v277
    %v279 = vrot.slane %v147, %v278
    %v280 = vlaneseq
    %v281 = vshrl.u32 %v280, 7
    %v282 = vsub.s32 %v192, %v281
    %v283 = vrot.slane %v150, %v282
    %v284 = vsel %vm197, %v283, %v279
    %v285 = vlaneseq
    %v286 = vshrl.u32 %v285, 7
    %v287 = vsub.s32 %v199, %v286
    %v288 = vrot.slane %v153, %v287
    %v289 = vsel %vm204, %v288, %v284
    %v290 = vlaneseq
    %v291 = vshrl.u32 %v290, 7
    %v292 = vsub.s32 %v187, %v291
    %v293 = vrot.slane %v156, %v292
    %v294 = vlaneseq
    %v295 = vshrl.u32 %v294, 7
    %v296 = vsub.s32 %v192, %v295
    %v297 = vrot.slane %v159, %v296
    %v298 = vsel %vm197, %v297, %v293
    %v299 = vlaneseq
    %v300 = vshrl.u32 %v299, 7
    %v301 = vsub.s32 %v199, %v300
    %v302 = vrot.slane %v162, %v301
    %v303 = vsel %vm204, %v302, %v298
    %vm304 = vcmask 1041409
    %v305 = vsel %vm304, %v219, %v205
    %vm306 = vcmask 1042434
    %v307 = vsel %vm306, %v233, %v305
    %vm308 = vcmask 1043459
    %v309 = vsel %vm308, %v247, %v307
    %vm310 = vcmask 1044484
    %v311 = vsel %vm310, %v261, %v309
    %vm312 = vcmask 1045509
    %v313 = vsel %vm312, %v275, %v311
    %vm314 = vcmask 1046534
    %v315 = vsel %vm314, %v289, %v313
    %vm316 = vcmask 1047559
    %v317 = vsel %vm316, %v303, %v315
    %vm319 = vcmask 195592
    %320 = vst.msk [vmem:[#allocation2 + $0x1] sm:$0xff] %vm319, %v317
    %s321 = scalar_lea.vmem %s0, 192
    %v322 = vld [vmem:[%s321] sm:$0xff]
    %v323 = vld [vmem:[%s321 + $0x8] sm:$0xff]
    %v324 = vld [vmem:[%s321 + $0x10] sm:$0x7f]
    %v325 = vld [vmem:[%s321 + $0x18] sm:$0xff]
    %v326 = vld [vmem:[%s321 + $0x20] sm:$0xff]
    %v327 = vld [vmem:[%s321 + $0x28] sm:$0x7f]
    %v328 = vld [vmem:[%s321 + $0x30] sm:$0xff]
    %v329 = vld [vmem:[%s321 + $0x38] sm:$0xff]
    %v330 = vld [vmem:[%s321 + $0x40] sm:$0x7f]
    %v331 = vld [vmem:[%s321 + $0x48] sm:$0xff]
    %v332 = vld [vmem:[%s321 + $0x50] sm:$0xff]
    %v333 = vld [vmem:[%s321 + $0x58] sm:$0x7f]
    %v334 = vld [vmem:[%s321 + $0x60] sm:$0xff]
    %v335 = vld [vmem:[%s321 + $0x68] sm:$0xff]
    %v336 = vld [vmem:[%s321 + $0x70] sm:$0x7f]
    %v337 = vld [vmem:[%s321 + $0x78] sm:$0xff]
    %v338 = vld [vmem:[%s321 + $0x80] sm:$0xff]
    %v339 = vld [vmem:[%s321 + $0x88] sm:$0x7f]
    %v340 = vld [vmem:[%s321 + $0x90] sm:$0xff]
    %v341 = vld [vmem:[%s321 + $0x98] sm:$0xff]
    %v342 = vld [vmem:[%s321 + $0xa0] sm:$0x7f]
    %v343 = vld [vmem:[%s321 + $0xa8] sm:$0xff]
    %v344 = vld [vmem:[%s321 + $0xb0] sm:$0xff]
    %v345 = vld [vmem:[%s321 + $0xb8] sm:$0x7f]
    %v346 = vsel %vm64, %v322, 0.0
    %v347 = vsel %vm64, %v323, 0.0
    %v348 = vsel %vm64, %v324, 0.0
    %v349 = vsel %vm64, %v325, 0.0
    %v350 = vsel %vm64, %v326, 0.0
    %v351 = vsel %vm64, %v327, 0.0
    %v352 = vsel %vm64, %v328, 0.0
    %v353 = vsel %vm64, %v329, 0.0
    %v354 = vsel %vm64, %v330, 0.0
    %v355 = vsel %vm64, %v331, 0.0
    %v356 = vsel %vm64, %v332, 0.0
    %v357 = vsel %vm64, %v333, 0.0
    %v358 = vsel %vm64, %v334, 0.0
    %v359 = vsel %vm64, %v335, 0.0
    %v360 = vsel %vm64, %v336, 0.0
    %v361 = vsel %vm64, %v337, 0.0
    %v362 = vsel %vm64, %v338, 0.0
    %v363 = vsel %vm64, %v339, 0.0
    %v364 = vsel %vm64, %v340, 0.0
    %v365 = vsel %vm64, %v341, 0.0
    %v366 = vsel %vm64, %v342, 0.0
    %v367 = vsel %vm64, %v343, 0.0
    %v368 = vsel %vm64, %v344, 0.0
    %v369 = vsel %vm64, %v345, 0.0
    %v370 = vsel %vm89, %v346, 0.0
    %371 = vadd.xlane.f32.xlu0 %v370
    %v372 = vpop.xlane.xlu0 %371
    %v373 = vsel %vm89, %v347, 0.0
    %374 = vadd.xlane.f32.xlu0 %v373
    %v375 = vpop.xlane.xlu0 %374
    %v376 = vsel %vm96, %v348, 0.0
    %377 = vadd.xlane.f32.xlu0 %v376
    %v378 = vpop.xlane.xlu0 %377
    %v379 = vsel %vm89, %v349, 0.0
    %380 = vadd.xlane.f32.xlu0 %v379
    %v381 = vpop.xlane.xlu0 %380
    %v382 = vsel %vm89, %v350, 0.0
    %383 = vadd.xlane.f32.xlu0 %v382
    %v384 = vpop.xlane.xlu0 %383
    %v385 = vsel %vm96, %v351, 0.0
    %386 = vadd.xlane.f32.xlu0 %v385
    %v387 = vpop.xlane.xlu0 %386
    %v388 = vsel %vm89, %v352, 0.0
    %389 = vadd.xlane.f32.xlu0 %v388
    %v390 = vpop.xlane.xlu0 %389
    %v391 = vsel %vm89, %v353, 0.0
    %392 = vadd.xlane.f32.xlu0 %v391
    %v393 = vpop.xlane.xlu0 %392
    %v394 = vsel %vm96, %v354, 0.0
    %395 = vadd.xlane.f32.xlu0 %v394
    %v396 = vpop.xlane.xlu0 %395
    %v397 = vsel %vm89, %v355, 0.0
    %398 = vadd.xlane.f32.xlu0 %v397
    %v399 = vpop.xlane.xlu0 %398
    %v400 = vsel %vm89, %v356, 0.0
    %401 = vadd.xlane.f32.xlu0 %v400
    %v402 = vpop.xlane.xlu0 %401
    %v403 = vsel %vm96, %v357, 0.0
    %404 = vadd.xlane.f32.xlu0 %v403
    %v405 = vpop.xlane.xlu0 %404
    %v406 = vsel %vm89, %v358, 0.0
    %407 = vadd.xlane.f32.xlu0 %v406
    %v408 = vpop.xlane.xlu0 %407
    %v409 = vsel %vm89, %v359, 0.0
    %410 = vadd.xlane.f32.xlu0 %v409
    %v411 = vpop.xlane.xlu0 %410
    %v412 = vsel %vm96, %v360, 0.0
    %413 = vadd.xlane.f32.xlu0 %v412
    %v414 = vpop.xlane.xlu0 %413
    %v415 = vsel %vm89, %v361, 0.0
    %416 = vadd.xlane.f32.xlu0 %v415
    %v417 = vpop.xlane.xlu0 %416
    %v418 = vsel %vm89, %v362, 0.0
    %419 = vadd.xlane.f32.xlu0 %v418
    %v420 = vpop.xlane.xlu0 %419
    %v421 = vsel %vm96, %v363, 0.0
    %422 = vadd.xlane.f32.xlu0 %v421
    %v423 = vpop.xlane.xlu0 %422
    %v424 = vsel %vm89, %v364, 0.0
    %425 = vadd.xlane.f32.xlu0 %v424
    %v426 = vpop.xlane.xlu0 %425
    %v427 = vsel %vm89, %v365, 0.0
    %428 = vadd.xlane.f32.xlu0 %v427
    %v429 = vpop.xlane.xlu0 %428
    %v430 = vsel %vm96, %v366, 0.0
    %431 = vadd.xlane.f32.xlu0 %v430
    %v432 = vpop.xlane.xlu0 %431
    %v433 = vsel %vm89, %v367, 0.0
    %434 = vadd.xlane.f32.xlu0 %v433
    %v435 = vpop.xlane.xlu0 %434
    %v436 = vsel %vm89, %v368, 0.0
    %437 = vadd.xlane.f32.xlu0 %v436
    %v438 = vpop.xlane.xlu0 %437
    %v439 = vsel %vm96, %v369, 0.0
    %440 = vadd.xlane.f32.xlu0 %v439
    %v441 = vpop.xlane.xlu0 %440
    %v466 = vlaneseq
    %v467 = vshrl.u32 %v466, 7
    %v468 = vsub.s32 %v187, %v467
    %v469 = vrot.slane %v372, %v468
    %v470 = vlaneseq
    %v471 = vshrl.u32 %v470, 7
    %v472 = vsub.s32 %v192, %v471
    %v473 = vrot.slane %v375, %v472
    %v474 = vsel %vm197, %v473, %v469
    %v475 = vlaneseq
    %v476 = vshrl.u32 %v475, 7
    %v477 = vsub.s32 %v199, %v476
    %v478 = vrot.slane %v378, %v477
    %v479 = vsel %vm204, %v478, %v474
    %v480 = vlaneseq
    %v481 = vshrl.u32 %v480, 7
    %v482 = vsub.s32 %v187, %v481
    %v483 = vrot.slane %v381, %v482
    %v484 = vlaneseq
    %v485 = vshrl.u32 %v484, 7
    %v486 = vsub.s32 %v192, %v485
    %v487 = vrot.slane %v384, %v486
    %v488 = vsel %vm197, %v487, %v483
    %v489 = vlaneseq
    %v490 = vshrl.u32 %v489, 7
    %v491 = vsub.s32 %v199, %v490
    %v492 = vrot.slane %v387, %v491
    %v493 = vsel %vm204, %v492, %v488
    %v494 = vlaneseq
    %v495 = vshrl.u32 %v494, 7
    %v496 = vsub.s32 %v187, %v495
    %v497 = vrot.slane %v390, %v496
    %v498 = vlaneseq
    %v499 = vshrl.u32 %v498, 7
    %v500 = vsub.s32 %v192, %v499
    %v501 = vrot.slane %v393, %v500
    %v502 = vsel %vm197, %v501, %v497
    %v503 = vlaneseq
    %v504 = vshrl.u32 %v503, 7
    %v505 = vsub.s32 %v199, %v504
    %v506 = vrot.slane %v396, %v505
    %v507 = vsel %vm204, %v506, %v502
    %v508 = vlaneseq
    %v509 = vshrl.u32 %v508, 7
    %v510 = vsub.s32 %v187, %v509
    %v511 = vrot.slane %v399, %v510
    %v512 = vlaneseq
    %v513 = vshrl.u32 %v512, 7
    %v514 = vsub.s32 %v192, %v513
    %v515 = vrot.slane %v402, %v514
    %v516 = vsel %vm197, %v515, %v511
    %v517 = vlaneseq
    %v518 = vshrl.u32 %v517, 7
    %v519 = vsub.s32 %v199, %v518
    %v520 = vrot.slane %v405, %v519
    %v521 = vsel %vm204, %v520, %v516
    %v522 = vlaneseq
    %v523 = vshrl.u32 %v522, 7
    %v524 = vsub.s32 %v187, %v523
    %v525 = vrot.slane %v408, %v524
    %v526 = vlaneseq
    %v527 = vshrl.u32 %v526, 7
    %v528 = vsub.s32 %v192, %v527
    %v529 = vrot.slane %v411, %v528
    %v530 = vsel %vm197, %v529, %v525
    %v531 = vlaneseq
    %v532 = vshrl.u32 %v531, 7
    %v533 = vsub.s32 %v199, %v532
    %v534 = vrot.slane %v414, %v533
    %v535 = vsel %vm204, %v534, %v530
    %v536 = vlaneseq
    %v537 = vshrl.u32 %v536, 7
    %v538 = vsub.s32 %v187, %v537
    %v539 = vrot.slane %v417, %v538
    %v540 = vlaneseq
    %v541 = vshrl.u32 %v540, 7
    %v542 = vsub.s32 %v192, %v541
    %v543 = vrot.slane %v420, %v542
    %v544 = vsel %vm197, %v543, %v539
    %v545 = vlaneseq
    %v546 = vshrl.u32 %v545, 7
    %v547 = vsub.s32 %v199, %v546
    %v548 = vrot.slane %v423, %v547
    %v549 = vsel %vm204, %v548, %v544
    %v550 = vlaneseq
    %v551 = vshrl.u32 %v550, 7
    %v552 = vsub.s32 %v187, %v551
    %v553 = vrot.slane %v426, %v552
    %v554 = vlaneseq
    %v555 = vshrl.u32 %v554, 7
    %v556 = vsub.s32 %v192, %v555
    %v557 = vrot.slane %v429, %v556
    %v558 = vsel %vm197, %v557, %v553
    %v559 = vlaneseq
    %v560 = vshrl.u32 %v559, 7
    %v561 = vsub.s32 %v199, %v560
    %v562 = vrot.slane %v432, %v561
    %v563 = vsel %vm204, %v562, %v558
    %v564 = vlaneseq
    %v565 = vshrl.u32 %v564, 7
    %v566 = vsub.s32 %v187, %v565
    %v567 = vrot.slane %v435, %v566
    %v568 = vlaneseq
    %v569 = vshrl.u32 %v568, 7
    %v570 = vsub.s32 %v192, %v569
    %v571 = vrot.slane %v438, %v570
    %v572 = vsel %vm197, %v571, %v567
    %v573 = vlaneseq
    %v574 = vshrl.u32 %v573, 7
    %v575 = vsub.s32 %v199, %v574
    %v576 = vrot.slane %v441, %v575
    %v577 = vsel %vm204, %v576, %v572
    %v578 = vsel %vm304, %v493, %v479
    %v579 = vsel %vm306, %v507, %v578
    %v580 = vsel %vm308, %v521, %v579
    %v581 = vsel %vm310, %v535, %v580
    %v582 = vsel %vm312, %v549, %v581
    %v583 = vsel %vm314, %v563, %v582
    %v584 = vsel %vm316, %v577, %v583
    %586 = vst.msk [vmem:[#allocation2 + $0x9] sm:$0xff] %vm319, %v584
    %s587 = scalar_lea.vmem %s0, 384
    %v588 = vld [vmem:[%s587] sm:$0xff]
    %v589 = vld [vmem:[%s587 + $0x8] sm:$0xff]
    %v590 = vld [vmem:[%s587 + $0x10] sm:$0x7f]
    %v591 = vld [vmem:[%s587 + $0x18] sm:$0xff]
    %v592 = vld [vmem:[%s587 + $0x20] sm:$0xff]
    %v593 = vld [vmem:[%s587 + $0x28] sm:$0x7f]
    %v594 = vld [vmem:[%s587 + $0x30] sm:$0xff]
    %v595 = vld [vmem:[%s587 + $0x38] sm:$0xff]
    %v596 = vld [vmem:[%s587 + $0x40] sm:$0x7f]
    %v597 = vld [vmem:[%s587 + $0x48] sm:$0xff]
    %v598 = vld [vmem:[%s587 + $0x50] sm:$0xff]
    %v599 = vld [vmem:[%s587 + $0x58] sm:$0x7f]
    %v600 = vld [vmem:[%s587 + $0x60] sm:$0xff]
    %v601 = vld [vmem:[%s587 + $0x68] sm:$0xff]
    %v602 = vld [vmem:[%s587 + $0x70] sm:$0x7f]
    %v603 = vld [vmem:[%s587 + $0x78] sm:$0xff]
    %v604 = vld [vmem:[%s587 + $0x80] sm:$0xff]
    %v605 = vld [vmem:[%s587 + $0x88] sm:$0x7f]
    %v606 = vld [vmem:[%s587 + $0x90] sm:$0xff]
    %v607 = vld [vmem:[%s587 + $0x98] sm:$0xff]
    %v608 = vld [vmem:[%s587 + $0xa0] sm:$0x7f]
    %v609 = vsel %vm64, %v588, 0.0
    %v610 = vsel %vm64, %v589, 0.0
    %v611 = vsel %vm64, %v590, 0.0
    %v612 = vsel %vm64, %v591, 0.0
    %v613 = vsel %vm64, %v592, 0.0
    %v614 = vsel %vm64, %v593, 0.0
    %v615 = vsel %vm64, %v594, 0.0
    %v616 = vsel %vm64, %v595, 0.0
    %v617 = vsel %vm64, %v596, 0.0
    %v618 = vsel %vm64, %v597, 0.0
    %v619 = vsel %vm64, %v598, 0.0
    %v620 = vsel %vm64, %v599, 0.0
    %v621 = vsel %vm64, %v600, 0.0
    %v622 = vsel %vm64, %v601, 0.0
    %v623 = vsel %vm64, %v602, 0.0
    %v624 = vsel %vm64, %v603, 0.0
    %v625 = vsel %vm64, %v604, 0.0
    %v626 = vsel %vm64, %v605, 0.0
    %v627 = vsel %vm64, %v606, 0.0
    %v628 = vsel %vm64, %v607, 0.0
    %v629 = vsel %vm64, %v608, 0.0
    %v630 = vsel %vm89, %v609, 0.0
    %631 = vadd.xlane.f32.xlu0 %v630
    %v632 = vpop.xlane.xlu0 %631
    %v633 = vsel %vm89, %v610, 0.0
    %634 = vadd.xlane.f32.xlu0 %v633
    %v635 = vpop.xlane.xlu0 %634
    %v636 = vsel %vm96, %v611, 0.0
    %637 = vadd.xlane.f32.xlu0 %v636
    %v638 = vpop.xlane.xlu0 %637
    %v639 = vsel %vm89, %v612, 0.0
    %640 = vadd.xlane.f32.xlu0 %v639
    %v641 = vpop.xlane.xlu0 %640
    %v642 = vsel %vm89, %v613, 0.0
    %643 = vadd.xlane.f32.xlu0 %v642
    %v644 = vpop.xlane.xlu0 %643
    %v645 = vsel %vm96, %v614, 0.0
    %646 = vadd.xlane.f32.xlu0 %v645
    %v647 = vpop.xlane.xlu0 %646
    %v648 = vsel %vm89, %v615, 0.0
    %649 = vadd.xlane.f32.xlu0 %v648
    %v650 = vpop.xlane.xlu0 %649
    %v651 = vsel %vm89, %v616, 0.0
    %652 = vadd.xlane.f32.xlu0 %v651
    %v653 = vpop.xlane.xlu0 %652
    %v654 = vsel %vm96, %v617, 0.0
    %655 = vadd.xlane.f32.xlu0 %v654
    %v656 = vpop.xlane.xlu0 %655
    %v657 = vsel %vm89, %v618, 0.0
    %658 = vadd.xlane.f32.xlu0 %v657
    %v659 = vpop.xlane.xlu0 %658
    %v660 = vsel %vm89, %v619, 0.0
    %661 = vadd.xlane.f32.xlu0 %v660
    %v662 = vpop.xlane.xlu0 %661
    %v663 = vsel %vm96, %v620, 0.0
    %664 = vadd.xlane.f32.xlu0 %v663
    %v665 = vpop.xlane.xlu0 %664
    %v666 = vsel %vm89, %v621, 0.0
    %667 = vadd.xlane.f32.xlu0 %v666
    %v668 = vpop.xlane.xlu0 %667
    %v669 = vsel %vm89, %v622, 0.0
    %670 = vadd.xlane.f32.xlu0 %v669
    %v671 = vpop.xlane.xlu0 %670
    %v672 = vsel %vm96, %v623, 0.0
    %673 = vadd.xlane.f32.xlu0 %v672
    %v674 = vpop.xlane.xlu0 %673
    %v675 = vsel %vm89, %v624, 0.0
    %676 = vadd.xlane.f32.xlu0 %v675
    %v677 = vpop.xlane.xlu0 %676
    %v678 = vsel %vm89, %v625, 0.0
    %679 = vadd.xlane.f32.xlu0 %v678
    %v680 = vpop.xlane.xlu0 %679
    %v681 = vsel %vm96, %v626, 0.0
    %682 = vadd.xlane.f32.xlu0 %v681
    %v683 = vpop.xlane.xlu0 %682
    %v684 = vsel %vm89, %v627, 0.0
    %685 = vadd.xlane.f32.xlu0 %v684
    %v686 = vpop.xlane.xlu0 %685
    %v687 = vsel %vm89, %v628, 0.0
    %688 = vadd.xlane.f32.xlu0 %v687
    %v689 = vpop.xlane.xlu0 %688
    %v690 = vsel %vm96, %v629, 0.0
    %691 = vadd.xlane.f32.xlu0 %v690
    %v692 = vpop.xlane.xlu0 %691
    %v714 = vlaneseq
    %v715 = vshrl.u32 %v714, 7
    %v716 = vsub.s32 %v187, %v715
    %v717 = vrot.slane %v632, %v716
    %v718 = vlaneseq
    %v719 = vshrl.u32 %v718, 7
    %v720 = vsub.s32 %v192, %v719
    %v721 = vrot.slane %v635, %v720
    %v722 = vsel %vm197, %v721, %v717
    %v723 = vlaneseq
    %v724 = vshrl.u32 %v723, 7
    %v725 = vsub.s32 %v199, %v724
    %v726 = vrot.slane %v638, %v725
    %v727 = vsel %vm204, %v726, %v722
    %v728 = vlaneseq
    %v729 = vshrl.u32 %v728, 7
    %v730 = vsub.s32 %v187, %v729
    %v731 = vrot.slane %v641, %v730
    %v732 = vlaneseq
    %v733 = vshrl.u32 %v732, 7
    %v734 = vsub.s32 %v192, %v733
    %v735 = vrot.slane %v644, %v734
    %v736 = vsel %vm197, %v735, %v731
    %v737 = vlaneseq
    %v738 = vshrl.u32 %v737, 7
    %v739 = vsub.s32 %v199, %v738
    %v740 = vrot.slane %v647, %v739
    %v741 = vsel %vm204, %v740, %v736
    %v742 = vlaneseq
    %v743 = vshrl.u32 %v742, 7
    %v744 = vsub.s32 %v187, %v743
    %v745 = vrot.slane %v650, %v744
    %v746 = vlaneseq
    %v747 = vshrl.u32 %v746, 7
    %v748 = vsub.s32 %v192, %v747
    %v749 = vrot.slane %v653, %v748
    %v750 = vsel %vm197, %v749, %v745
    %v751 = vlaneseq
    %v752 = vshrl.u32 %v751, 7
    %v753 = vsub.s32 %v199, %v752
    %v754 = vrot.slane %v656, %v753
    %v755 = vsel %vm204, %v754, %v750
    %v756 = vlaneseq
    %v757 = vshrl.u32 %v756, 7
    %v758 = vsub.s32 %v187, %v757
    %v759 = vrot.slane %v659, %v758
    %v760 = vlaneseq
    %v761 = vshrl.u32 %v760, 7
    %v762 = vsub.s32 %v192, %v761
    %v763 = vrot.slane %v662, %v762
    %v764 = vsel %vm197, %v763, %v759
    %v765 = vlaneseq
    %v766 = vshrl.u32 %v765, 7
    %v767 = vsub.s32 %v199, %v766
    %v768 = vrot.slane %v665, %v767
    %v769 = vsel %vm204, %v768, %v764
    %v770 = vlaneseq
    %v771 = vshrl.u32 %v770, 7
    %v772 = vsub.s32 %v187, %v771
    %v773 = vrot.slane %v668, %v772
    %v774 = vlaneseq
    %v775 = vshrl.u32 %v774, 7
    %v776 = vsub.s32 %v192, %v775
    %v777 = vrot.slane %v671, %v776
    %v778 = vsel %vm197, %v777, %v773
    %v779 = vlaneseq
    %v780 = vshrl.u32 %v779, 7
    %v781 = vsub.s32 %v199, %v780
    %v782 = vrot.slane %v674, %v781
    %v783 = vsel %vm204, %v782, %v778
    %v784 = vlaneseq
    %v785 = vshrl.u32 %v784, 7
    %v786 = vsub.s32 %v187, %v785
    %v787 = vrot.slane %v677, %v786
    %v788 = vlaneseq
    %v789 = vshrl.u32 %v788, 7
    %v790 = vsub.s32 %v192, %v789
    %v791 = vrot.slane %v680, %v790
    %v792 = vsel %vm197, %v791, %v787
    %v793 = vlaneseq
    %v794 = vshrl.u32 %v793, 7
    %v795 = vsub.s32 %v199, %v794
    %v796 = vrot.slane %v683, %v795
    %v797 = vsel %vm204, %v796, %v792
    %v798 = vlaneseq
    %v799 = vshrl.u32 %v798, 7
    %v800 = vsub.s32 %v187, %v799
    %v801 = vrot.slane %v686, %v800
    %v802 = vlaneseq
    %v803 = vshrl.u32 %v802, 7
    %v804 = vsub.s32 %v192, %v803
    %v805 = vrot.slane %v689, %v804
    %v806 = vsel %vm197, %v805, %v801
    %v807 = vlaneseq
    %v808 = vshrl.u32 %v807, 7
    %v809 = vsub.s32 %v199, %v808
    %v810 = vrot.slane %v692, %v809
    %v811 = vsel %vm204, %v810, %v806
    %v812 = vsel %vm304, %v741, %v727
    %v813 = vsel %vm306, %v755, %v812
    %v814 = vsel %vm308, %v769, %v813
    %v815 = vsel %vm310, %v783, %v814
    %v816 = vsel %vm312, %v797, %v815
    %v817 = vsel %vm314, %v811, %v816
    %vm819 = vcmask 194568
    %820 = vst.msk [vmem:[#allocation2 + $0x11] sm:$0x7f] %vm819, %v817
    %s821 = scalar_lea.vmem %s0, 552
    %v822 = vld [vmem:[%s821] sm:$0xff]
    %v823 = vld [vmem:[%s821 + $0x8] sm:$0xff]
    %v824 = vld [vmem:[%s821 + $0x10] sm:$0x7f]
    %v825 = vld [vmem:[%s821 + $0x18] sm:$0xff]
    %v826 = vld [vmem:[%s821 + $0x20] sm:$0xff]
    %v827 = vld [vmem:[%s821 + $0x28] sm:$0x7f]
    %v828 = vld [vmem:[%s821 + $0x30] sm:$0xff]
    %v829 = vld [vmem:[%s821 + $0x38] sm:$0xff]
    %v830 = vld [vmem:[%s821 + $0x40] sm:$0x7f]
    %v831 = vld [vmem:[%s821 + $0x48] sm:$0xff]
    %v832 = vld [vmem:[%s821 + $0x50] sm:$0xff]
    %v833 = vld [vmem:[%s821 + $0x58] sm:$0x7f]
    %v834 = vld [vmem:[%s821 + $0x60] sm:$0xff]
    %v835 = vld [vmem:[%s821 + $0x68] sm:$0xff]
    %v836 = vld [vmem:[%s821 + $0x70] sm:$0x7f]
    %v837 = vld [vmem:[%s821 + $0x78] sm:$0xff]
    %v838 = vld [vmem:[%s821 + $0x80] sm:$0xff]
    %v839 = vld [vmem:[%s821 + $0x88] sm:$0x7f]
    %v840 = vld [vmem:[%s821 + $0x90] sm:$0xff]
    %v841 = vld [vmem:[%s821 + $0x98] sm:$0xff]
    %v842 = vld [vmem:[%s821 + $0xa0] sm:$0x7f]
    %v843 = vld [vmem:[%s821 + $0xa8] sm:$0xff]
    %v844 = vld [vmem:[%s821 + $0xb0] sm:$0xff]
    %v845 = vld [vmem:[%s821 + $0xb8] sm:$0x7f]
    %v846 = vsel %vm64, %v822, 0.0
    %v847 = vsel %vm64, %v823, 0.0
    %v848 = vsel %vm64, %v824, 0.0
    %v849 = vsel %vm64, %v825, 0.0
    %v850 = vsel %vm64, %v826, 0.0
    %v851 = vsel %vm64, %v827, 0.0
    %v852 = vsel %vm64, %v828, 0.0
    %v853 = vsel %vm64, %v829, 0.0
    %v854 = vsel %vm64, %v830, 0.0
    %v855 = vsel %vm64, %v831, 0.0
    %v856 = vsel %vm64, %v832, 0.0
    %v857 = vsel %vm64, %v833, 0.0
    %v858 = vsel %vm64, %v834, 0.0
    %v859 = vsel %vm64, %v835, 0.0
    %v860 = vsel %vm64, %v836, 0.0
    %v861 = vsel %vm64, %v837, 0.0
    %v862 = vsel %vm64, %v838, 0.0
    %v863 = vsel %vm64, %v839, 0.0
    %v864 = vsel %vm64, %v840, 0.0
    %v865 = vsel %vm64, %v841, 0.0
    %v866 = vsel %vm64, %v842, 0.0
    %v867 = vsel %vm64, %v843, 0.0
    %v868 = vsel %vm64, %v844, 0.0
    %v869 = vsel %vm64, %v845, 0.0
    %v870 = vsel %vm89, %v846, 0.0
    %871 = vadd.xlane.f32.xlu0 %v870
    %v872 = vpop.xlane.xlu0 %871
    %v873 = vsel %vm89, %v847, 0.0
    %874 = vadd.xlane.f32.xlu0 %v873
    %v875 = vpop.xlane.xlu0 %874
    %v876 = vsel %vm96, %v848, 0.0
    %877 = vadd.xlane.f32.xlu0 %v876
    %v878 = vpop.xlane.xlu0 %877
    %v879 = vsel %vm89, %v849, 0.0
    %880 = vadd.xlane.f32.xlu0 %v879
    %v881 = vpop.xlane.xlu0 %880
    %v882 = vsel %vm89, %v850, 0.0
    %883 = vadd.xlane.f32.xlu0 %v882
    %v884 = vpop.xlane.xlu0 %883
    %v885 = vsel %vm96, %v851, 0.0
    %886 = vadd.xlane.f32.xlu0 %v885
    %v887 = vpop.xlane.xlu0 %886
    %v888 = vsel %vm89, %v852, 0.0
    %889 = vadd.xlane.f32.xlu0 %v888
    %v890 = vpop.xlane.xlu0 %889
    %v891 = vsel %vm89, %v853, 0.0
    %892 = vadd.xlane.f32.xlu0 %v891
    %v893 = vpop.xlane.xlu0 %892
    %v894 = vsel %vm96, %v854, 0.0
    %895 = vadd.xlane.f32.xlu0 %v894
    %v896 = vpop.xlane.xlu0 %895
    %v897 = vsel %vm89, %v855, 0.0
    %898 = vadd.xlane.f32.xlu0 %v897
    %v899 = vpop.xlane.xlu0 %898
    %v900 = vsel %vm89, %v856, 0.0
    %901 = vadd.xlane.f32.xlu0 %v900
    %v902 = vpop.xlane.xlu0 %901
    %v903 = vsel %vm96, %v857, 0.0
    %904 = vadd.xlane.f32.xlu0 %v903
    %v905 = vpop.xlane.xlu0 %904
    %v906 = vsel %vm89, %v858, 0.0
    %907 = vadd.xlane.f32.xlu0 %v906
    %v908 = vpop.xlane.xlu0 %907
    %v909 = vsel %vm89, %v859, 0.0
    %910 = vadd.xlane.f32.xlu0 %v909
    %v911 = vpop.xlane.xlu0 %910
    %v912 = vsel %vm96, %v860, 0.0
    %913 = vadd.xlane.f32.xlu0 %v912
    %v914 = vpop.xlane.xlu0 %913
    %v915 = vsel %vm89, %v861, 0.0
    %916 = vadd.xlane.f32.xlu0 %v915
    %v917 = vpop.xlane.xlu0 %916
    %v918 = vsel %vm89, %v862, 0.0
    %919 = vadd.xlane.f32.xlu0 %v918
    %v920 = vpop.xlane.xlu0 %919
    %v921 = vsel %vm96, %v863, 0.0
    %922 = vadd.xlane.f32.xlu0 %v921
    %v923 = vpop.xlane.xlu0 %922
    %v924 = vsel %vm89, %v864, 0.0
    %925 = vadd.xlane.f32.xlu0 %v924
    %v926 = vpop.xlane.xlu0 %925
    %v927 = vsel %vm89, %v865, 0.0
    %928 = vadd.xlane.f32.xlu0 %v927
    %v929 = vpop.xlane.xlu0 %928
    %v930 = vsel %vm96, %v866, 0.0
    %931 = vadd.xlane.f32.xlu0 %v930
    %v932 = vpop.xlane.xlu0 %931
    %v933 = vsel %vm89, %v867, 0.0
    %934 = vadd.xlane.f32.xlu0 %v933
    %v935 = vpop.xlane.xlu0 %934
    %v936 = vsel %vm89, %v868, 0.0
    %937 = vadd.xlane.f32.xlu0 %v936
    %v938 = vpop.xlane.xlu0 %937
    %v939 = vsel %vm96, %v869, 0.0
    %940 = vadd.xlane.f32.xlu0 %v939
    %v941 = vpop.xlane.xlu0 %940
    %v966 = vlaneseq
    %v967 = vshrl.u32 %v966, 7
    %v968 = vsub.s32 %v187, %v967
    %v969 = vrot.slane %v872, %v968
    %v970 = vlaneseq
    %v971 = vshrl.u32 %v970, 7
    %v972 = vsub.s32 %v192, %v971
    %v973 = vrot.slane %v875, %v972
    %v974 = vsel %vm197, %v973, %v969
    %v975 = vlaneseq
    %v976 = vshrl.u32 %v975, 7
    %v977 = vsub.s32 %v199, %v976
    %v978 = vrot.slane %v878, %v977
    %v979 = vsel %vm204, %v978, %v974
    %v980 = vlaneseq
    %v981 = vshrl.u32 %v980, 7
    %v982 = vsub.s32 %v187, %v981
    %v983 = vrot.slane %v881, %v982
    %v984 = vlaneseq
    %v985 = vshrl.u32 %v984, 7
    %v986 = vsub.s32 %v192, %v985
    %v987 = vrot.slane %v884, %v986
    %v988 = vsel %vm197, %v987, %v983
    %v989 = vlaneseq
    %v990 = vshrl.u32 %v989, 7
    %v991 = vsub.s32 %v199, %v990
    %v992 = vrot.slane %v887, %v991
    %v993 = vsel %vm204, %v992, %v988
    %v994 = vlaneseq
    %v995 = vshrl.u32 %v994, 7
    %v996 = vsub.s32 %v187, %v995
    %v997 = vrot.slane %v890, %v996
    %v998 = vlaneseq
    %v999 = vshrl.u32 %v998, 7
    %v1000 = vsub.s32 %v192, %v999
    %v1001 = vrot.slane %v893, %v1000
    %v1002 = vsel %vm197, %v1001, %v997
    %v1003 = vlaneseq
    %v1004 = vshrl.u32 %v1003, 7
    %v1005 = vsub.s32 %v199, %v1004
    %v1006 = vrot.slane %v896, %v1005
    %v1007 = vsel %vm204, %v1006, %v1002
    %v1008 = vlaneseq
    %v1009 = vshrl.u32 %v1008, 7
    %v1010 = vsub.s32 %v187, %v1009
    %v1011 = vrot.slane %v899, %v1010
    %v1012 = vlaneseq
    %v1013 = vshrl.u32 %v1012, 7
    %v1014 = vsub.s32 %v192, %v1013
    %v1015 = vrot.slane %v902, %v1014
    %v1016 = vsel %vm197, %v1015, %v1011
    %v1017 = vlaneseq
    %v1018 = vshrl.u32 %v1017, 7
    %v1019 = vsub.s32 %v199, %v1018
    %v1020 = vrot.slane %v905, %v1019
    %v1021 = vsel %vm204, %v1020, %v1016
    %v1022 = vlaneseq
    %v1023 = vshrl.u32 %v1022, 7
    %v1024 = vsub.s32 %v187, %v1023
    %v1025 = vrot.slane %v908, %v1024
    %v1026 = vlaneseq
    %v1027 = vshrl.u32 %v1026, 7
    %v1028 = vsub.s32 %v192, %v1027
    %v1029 = vrot.slane %v911, %v1028
    %v1030 = vsel %vm197, %v1029, %v1025
    %v1031 = vlaneseq
    %v1032 = vshrl.u32 %v1031, 7
    %v1033 = vsub.s32 %v199, %v1032
    %v1034 = vrot.slane %v914, %v1033
    %v1035 = vsel %vm204, %v1034, %v1030
    %v1036 = vlaneseq
    %v1037 = vshrl.u32 %v1036, 7
    %v1038 = vsub.s32 %v187, %v1037
    %v1039 = vrot.slane %v917, %v1038
    %v1040 = vlaneseq
    %v1041 = vshrl.u32 %v1040, 7
    %v1042 = vsub.s32 %v192, %v1041
    %v1043 = vrot.slane %v920, %v1042
    %v1044 = vsel %vm197, %v1043, %v1039
    %v1045 = vlaneseq
    %v1046 = vshrl.u32 %v1045, 7
    %v1047 = vsub.s32 %v199, %v1046
    %v1048 = vrot.slane %v923, %v1047
    %v1049 = vsel %vm204, %v1048, %v1044
    %v1050 = vlaneseq
    %v1051 = vshrl.u32 %v1050, 7
    %v1052 = vsub.s32 %v187, %v1051
    %v1053 = vrot.slane %v926, %v1052
    %v1054 = vlaneseq
    %v1055 = vshrl.u32 %v1054, 7
    %v1056 = vsub.s32 %v192, %v1055
    %v1057 = vrot.slane %v929, %v1056
    %v1058 = vsel %vm197, %v1057, %v1053
    %v1059 = vlaneseq
    %v1060 = vshrl.u32 %v1059, 7
    %v1061 = vsub.s32 %v199, %v1060
    %v1062 = vrot.slane %v932, %v1061
    %v1063 = vsel %vm204, %v1062, %v1058
    %v1064 = vlaneseq
    %v1065 = vshrl.u32 %v1064, 7
    %v1066 = vsub.s32 %v187, %v1065
    %v1067 = vrot.slane %v935, %v1066
    %v1068 = vlaneseq
    %v1069 = vshrl.u32 %v1068, 7
    %v1070 = vsub.s32 %v192, %v1069
    %v1071 = vrot.slane %v938, %v1070
    %v1072 = vsel %vm197, %v1071, %v1067
    %v1073 = vlaneseq
    %v1074 = vshrl.u32 %v1073, 7
    %v1075 = vsub.s32 %v199, %v1074
    %v1076 = vrot.slane %v941, %v1075
    %v1077 = vsel %vm204, %v1076, %v1072
    %v1078 = vsel %vm304, %v993, %v979
    %v1079 = vsel %vm306, %v1007, %v1078
    %v1080 = vsel %vm308, %v1021, %v1079
    %v1081 = vsel %vm310, %v1035, %v1080
    %v1082 = vsel %vm312, %v1049, %v1081
    %v1083 = vsel %vm314, %v1063, %v1082
    %v1084 = vsel %vm316, %v1077, %v1083
    %s1086 = scalar_lea.vmem [#allocation2], 32
    %1087 = vst.msk [vmem:[%s1086 + $0x1] sm:$0xff] %vm319, %v1084
    %s1088 = scalar_lea.vmem %s0, 744
    %v1089 = vld [vmem:[%s1088] sm:$0xff]
    %v1090 = vld [vmem:[%s1088 + $0x8] sm:$0xff]
    %v1091 = vld [vmem:[%s1088 + $0x10] sm:$0x7f]
    %v1092 = vld [vmem:[%s1088 + $0x18] sm:$0xff]
    %v1093 = vld [vmem:[%s1088 + $0x20] sm:$0xff]
    %v1094 = vld [vmem:[%s1088 + $0x28] sm:$0x7f]
    %v1095 = vld [vmem:[%s1088 + $0x30] sm:$0xff]
    %v1096 = vld [vmem:[%s1088 + $0x38] sm:$0xff]
    %v1097 = vld [vmem:[%s1088 + $0x40] sm:$0x7f]
    %v1098 = vld [vmem:[%s1088 + $0x48] sm:$0xff]
    %v1099 = vld [vmem:[%s1088 + $0x50] sm:$0xff]
    %v1100 = vld [vmem:[%s1088 + $0x58] sm:$0x7f]
    %v1101 = vld [vmem:[%s1088 + $0x60] sm:$0xff]
    %v1102 = vld [vmem:[%s1088 + $0x68] sm:$0xff]
    %v1103 = vld [vmem:[%s1088 + $0x70] sm:$0x7f]
    %v1104 = vld [vmem:[%s1088 + $0x78] sm:$0xff]
    %v1105 = vld [vmem:[%s1088 + $0x80] sm:$0xff]
    %v1106 = vld [vmem:[%s1088 + $0x88] sm:$0x7f]
    %v1107 = vld [vmem:[%s1088 + $0x90] sm:$0xff]
    %v1108 = vld [vmem:[%s1088 + $0x98] sm:$0xff]
    %v1109 = vld [vmem:[%s1088 + $0xa0] sm:$0x7f]
    %v1110 = vld [vmem:[%s1088 + $0xa8] sm:$0xff]
    %v1111 = vld [vmem:[%s1088 + $0xb0] sm:$0xff]
    %v1112 = vld [vmem:[%s1088 + $0xb8] sm:$0x7f]
    %v1113 = vsel %vm64, %v1089, 0.0
    %v1114 = vsel %vm64, %v1090, 0.0
    %v1115 = vsel %vm64, %v1091, 0.0
    %v1116 = vsel %vm64, %v1092, 0.0
    %v1117 = vsel %vm64, %v1093, 0.0
    %v1118 = vsel %vm64, %v1094, 0.0
    %v1119 = vsel %vm64, %v1095, 0.0
    %v1120 = vsel %vm64, %v1096, 0.0
    %v1121 = vsel %vm64, %v1097, 0.0
    %v1122 = vsel %vm64, %v1098, 0.0
    %v1123 = vsel %vm64, %v1099, 0.0
    %v1124 = vsel %vm64, %v1100, 0.0
    %v1125 = vsel %vm64, %v1101, 0.0
    %v1126 = vsel %vm64, %v1102, 0.0
    %v1127 = vsel %vm64, %v1103, 0.0
    %v1128 = vsel %vm64, %v1104, 0.0
    %v1129 = vsel %vm64, %v1105, 0.0
    %v1130 = vsel %vm64, %v1106, 0.0
    %v1131 = vsel %vm64, %v1107, 0.0
    %v1132 = vsel %vm64, %v1108, 0.0
    %v1133 = vsel %vm64, %v1109, 0.0
    %v1134 = vsel %vm64, %v1110, 0.0
    %v1135 = vsel %vm64, %v1111, 0.0
    %v1136 = vsel %vm64, %v1112, 0.0
    %v1137 = vsel %vm89, %v1113, 0.0
    %1138 = vadd.xlane.f32.xlu0 %v1137
    %v1139 = vpop.xlane.xlu0 %1138
    %v1140 = vsel %vm89, %v1114, 0.0
    %1141 = vadd.xlane.f32.xlu0 %v1140
    %v1142 = vpop.xlane.xlu0 %1141
    %v1143 = vsel %vm96, %v1115, 0.0
    %1144 = vadd.xlane.f32.xlu0 %v1143
    %v1145 = vpop.xlane.xlu0 %1144
    %v1146 = vsel %vm89, %v1116, 0.0
    %1147 = vadd.xlane.f32.xlu0 %v1146
    %v1148 = vpop.xlane.xlu0 %1147
    %v1149 = vsel %vm89, %v1117, 0.0
    %1150 = vadd.xlane.f32.xlu0 %v1149
    %v1151 = vpop.xlane.xlu0 %1150
    %v1152 = vsel %vm96, %v1118, 0.0
    %1153 = vadd.xlane.f32.xlu0 %v1152
    %v1154 = vpop.xlane.xlu0 %1153
    %v1155 = vsel %vm89, %v1119, 0.0
    %1156 = vadd.xlane.f32.xlu0 %v1155
    %v1157 = vpop.xlane.xlu0 %1156
    %v1158 = vsel %vm89, %v1120, 0.0
    %1159 = vadd.xlane.f32.xlu0 %v1158
    %v1160 = vpop.xlane.xlu0 %1159
    %v1161 = vsel %vm96, %v1121, 0.0
    %1162 = vadd.xlane.f32.xlu0 %v1161
    %v1163 = vpop.xlane.xlu0 %1162
    %v1164 = vsel %vm89, %v1122, 0.0
    %1165 = vadd.xlane.f32.xlu0 %v1164
    %v1166 = vpop.xlane.xlu0 %1165
    %v1167 = vsel %vm89, %v1123, 0.0
    %1168 = vadd.xlane.f32.xlu0 %v1167
    %v1169 = vpop.xlane.xlu0 %1168
    %v1170 = vsel %vm96, %v1124, 0.0
    %1171 = vadd.xlane.f32.xlu0 %v1170
    %v1172 = vpop.xlane.xlu0 %1171
    %v1173 = vsel %vm89, %v1125, 0.0
    %1174 = vadd.xlane.f32.xlu0 %v1173
    %v1175 = vpop.xlane.xlu0 %1174
    %v1176 = vsel %vm89, %v1126, 0.0
    %1177 = vadd.xlane.f32.xlu0 %v1176
    %v1178 = vpop.xlane.xlu0 %1177
    %v1179 = vsel %vm96, %v1127, 0.0
    %1180 = vadd.xlane.f32.xlu0 %v1179
    %v1181 = vpop.xlane.xlu0 %1180
    %v1182 = vsel %vm89, %v1128, 0.0
    %1183 = vadd.xlane.f32.xlu0 %v1182
    %v1184 = vpop.xlane.xlu0 %1183
    %v1185 = vsel %vm89, %v1129, 0.0
    %1186 = vadd.xlane.f32.xlu0 %v1185
    %v1187 = vpop.xlane.xlu0 %1186
    %v1188 = vsel %vm96, %v1130, 0.0
    %1189 = vadd.xlane.f32.xlu0 %v1188
    %v1190 = vpop.xlane.xlu0 %1189
    %v1191 = vsel %vm89, %v1131, 0.0
    %1192 = vadd.xlane.f32.xlu0 %v1191
    %v1193 = vpop.xlane.xlu0 %1192
    %v1194 = vsel %vm89, %v1132, 0.0
    %1195 = vadd.xlane.f32.xlu0 %v1194
    %v1196 = vpop.xlane.xlu0 %1195
    %v1197 = vsel %vm96, %v1133, 0.0
    %1198 = vadd.xlane.f32.xlu0 %v1197
    %v1199 = vpop.xlane.xlu0 %1198
    %v1200 = vsel %vm89, %v1134, 0.0
    %1201 = vadd.xlane.f32.xlu0 %v1200
    %v1202 = vpop.xlane.xlu0 %1201
    %v1203 = vsel %vm89, %v1135, 0.0
    %1204 = vadd.xlane.f32.xlu0 %v1203
    %v1205 = vpop.xlane.xlu0 %1204
    %v1206 = vsel %vm96, %v1136, 0.0
    %1207 = vadd.xlane.f32.xlu0 %v1206
    %v1208 = vpop.xlane.xlu0 %1207
    %v1233 = vlaneseq
    %v1234 = vshrl.u32 %v1233, 7
    %v1235 = vsub.s32 %v187, %v1234
    %v1236 = vrot.slane %v1139, %v1235
    %v1237 = vlaneseq
    %v1238 = vshrl.u32 %v1237, 7
    %v1239 = vsub.s32 %v192, %v1238
    %v1240 = vrot.slane %v1142, %v1239
    %v1241 = vsel %vm197, %v1240, %v1236
    %v1242 = vlaneseq
    %v1243 = vshrl.u32 %v1242, 7
    %v1244 = vsub.s32 %v199, %v1243
    %v1245 = vrot.slane %v1145, %v1244
    %v1246 = vsel %vm204, %v1245, %v1241
    %v1247 = vlaneseq
    %v1248 = vshrl.u32 %v1247, 7
    %v1249 = vsub.s32 %v187, %v1248
    %v1250 = vrot.slane %v1148, %v1249
    %v1251 = vlaneseq
    %v1252 = vshrl.u32 %v1251, 7
    %v1253 = vsub.s32 %v192, %v1252
    %v1254 = vrot.slane %v1151, %v1253
    %v1255 = vsel %vm197, %v1254, %v1250
    %v1256 = vlaneseq
    %v1257 = vshrl.u32 %v1256, 7
    %v1258 = vsub.s32 %v199, %v1257
    %v1259 = vrot.slane %v1154, %v1258
    %v1260 = vsel %vm204, %v1259, %v1255
    %v1261 = vlaneseq
    %v1262 = vshrl.u32 %v1261, 7
    %v1263 = vsub.s32 %v187, %v1262
    %v1264 = vrot.slane %v1157, %v1263
    %v1265 = vlaneseq
    %v1266 = vshrl.u32 %v1265, 7
    %v1267 = vsub.s32 %v192, %v1266
    %v1268 = vrot.slane %v1160, %v1267
    %v1269 = vsel %vm197, %v1268, %v1264
    %v1270 = vlaneseq
    %v1271 = vshrl.u32 %v1270, 7
    %v1272 = vsub.s32 %v199, %v1271
    %v1273 = vrot.slane %v1163, %v1272
    %v1274 = vsel %vm204, %v1273, %v1269
    %v1275 = vlaneseq
    %v1276 = vshrl.u32 %v1275, 7
    %v1277 = vsub.s32 %v187, %v1276
    %v1278 = vrot.slane %v1166, %v1277
    %v1279 = vlaneseq
    %v1280 = vshrl.u32 %v1279, 7
    %v1281 = vsub.s32 %v192, %v1280
    %v1282 = vrot.slane %v1169, %v1281
    %v1283 = vsel %vm197, %v1282, %v1278
    %v1284 = vlaneseq
    %v1285 = vshrl.u32 %v1284, 7
    %v1286 = vsub.s32 %v199, %v1285
    %v1287 = vrot.slane %v1172, %v1286
    %v1288 = vsel %vm204, %v1287, %v1283
    %v1289 = vlaneseq
    %v1290 = vshrl.u32 %v1289, 7
    %v1291 = vsub.s32 %v187, %v1290
    %v1292 = vrot.slane %v1175, %v1291
    %v1293 = vlaneseq
    %v1294 = vshrl.u32 %v1293, 7
    %v1295 = vsub.s32 %v192, %v1294
    %v1296 = vrot.slane %v1178, %v1295
    %v1297 = vsel %vm197, %v1296, %v1292
    %v1298 = vlaneseq
    %v1299 = vshrl.u32 %v1298, 7
    %v1300 = vsub.s32 %v199, %v1299
    %v1301 = vrot.slane %v1181, %v1300
    %v1302 = vsel %vm204, %v1301, %v1297
    %v1303 = vlaneseq
    %v1304 = vshrl.u32 %v1303, 7
    %v1305 = vsub.s32 %v187, %v1304
    %v1306 = vrot.slane %v1184, %v1305
    %v1307 = vlaneseq
    %v1308 = vshrl.u32 %v1307, 7
    %v1309 = vsub.s32 %v192, %v1308
    %v1310 = vrot.slane %v1187, %v1309
    %v1311 = vsel %vm197, %v1310, %v1306
    %v1312 = vlaneseq
    %v1313 = vshrl.u32 %v1312, 7
    %v1314 = vsub.s32 %v199, %v1313
    %v1315 = vrot.slane %v1190, %v1314
    %v1316 = vsel %vm204, %v1315, %v1311
    %v1317 = vlaneseq
    %v1318 = vshrl.u32 %v1317, 7
    %v1319 = vsub.s32 %v187, %v1318
    %v1320 = vrot.slane %v1193, %v1319
    %v1321 = vlaneseq
    %v1322 = vshrl.u32 %v1321, 7
    %v1323 = vsub.s32 %v192, %v1322
    %v1324 = vrot.slane %v1196, %v1323
    %v1325 = vsel %vm197, %v1324, %v1320
    %v1326 = vlaneseq
    %v1327 = vshrl.u32 %v1326, 7
    %v1328 = vsub.s32 %v199, %v1327
    %v1329 = vrot.slane %v1199, %v1328
    %v1330 = vsel %vm204, %v1329, %v1325
    %v1331 = vlaneseq
    %v1332 = vshrl.u32 %v1331, 7
    %v1333 = vsub.s32 %v187, %v1332
    %v1334 = vrot.slane %v1202, %v1333
    %v1335 = vlaneseq
    %v1336 = vshrl.u32 %v1335, 7
    %v1337 = vsub.s32 %v192, %v1336
    %v1338 = vrot.slane %v1205, %v1337
    %v1339 = vsel %vm197, %v1338, %v1334
    %v1340 = vlaneseq
    %v1341 = vshrl.u32 %v1340, 7
    %v1342 = vsub.s32 %v199, %v1341
    %v1343 = vrot.slane %v1208, %v1342
    %v1344 = vsel %vm204, %v1343, %v1339
    %v1345 = vsel %vm304, %v1260, %v1246
    %v1346 = vsel %vm306, %v1274, %v1345
    %v1347 = vsel %vm308, %v1288, %v1346
    %v1348 = vsel %vm310, %v1302, %v1347
    %v1349 = vsel %vm312, %v1316, %v1348
    %v1350 = vsel %vm314, %v1330, %v1349
    %v1351 = vsel %vm316, %v1344, %v1350
    %1353 = vst.msk [vmem:[%s1086 + $0x9] sm:$0xff] %vm319, %v1351
    %s1354 = scalar_lea.vmem %s0, 936
    %v1355 = vld [vmem:[%s1354] sm:$0xff]
    %v1356 = vld [vmem:[%s1354 + $0x8] sm:$0xff]
    %v1357 = vld [vmem:[%s1354 + $0x10] sm:$0x7f]
    %v1358 = vld [vmem:[%s1354 + $0x18] sm:$0xff]
    %v1359 = vld [vmem:[%s1354 + $0x20] sm:$0xff]
    %v1360 = vld [vmem:[%s1354 + $0x28] sm:$0x7f]
    %v1361 = vld [vmem:[%s1354 + $0x30] sm:$0xff]
    %v1362 = vld [vmem:[%s1354 + $0x38] sm:$0xff]
    %v1363 = vld [vmem:[%s1354 + $0x40] sm:$0x7f]
    %v1364 = vld [vmem:[%s1354 + $0x48] sm:$0xff]
    %v1365 = vld [vmem:[%s1354 + $0x50] sm:$0xff]
    %v1366 = vld [vmem:[%s1354 + $0x58] sm:$0x7f]
    %v1367 = vld [vmem:[%s1354 + $0x60] sm:$0xff]
    %v1368 = vld [vmem:[%s1354 + $0x68] sm:$0xff]
    %v1369 = vld [vmem:[%s1354 + $0x70] sm:$0x7f]
    %v1370 = vld [vmem:[%s1354 + $0x78] sm:$0xff]
    %v1371 = vld [vmem:[%s1354 + $0x80] sm:$0xff]
    %v1372 = vld [vmem:[%s1354 + $0x88] sm:$0x7f]
    %v1373 = vld [vmem:[%s1354 + $0x90] sm:$0xff]
    %v1374 = vld [vmem:[%s1354 + $0x98] sm:$0xff]
    %v1375 = vld [vmem:[%s1354 + $0xa0] sm:$0x7f]
    %v1376 = vsel %vm64, %v1355, 0.0
    %v1377 = vsel %vm64, %v1356, 0.0
    %v1378 = vsel %vm64, %v1357, 0.0
    %v1379 = vsel %vm64, %v1358, 0.0
    %v1380 = vsel %vm64, %v1359, 0.0
    %v1381 = vsel %vm64, %v1360, 0.0
    %v1382 = vsel %vm64, %v1361, 0.0
    %v1383 = vsel %vm64, %v1362, 0.0
    %v1384 = vsel %vm64, %v1363, 0.0
    %v1385 = vsel %vm64, %v1364, 0.0
    %v1386 = vsel %vm64, %v1365, 0.0
    %v1387 = vsel %vm64, %v1366, 0.0
    %v1388 = vsel %vm64, %v1367, 0.0
    %v1389 = vsel %vm64, %v1368, 0.0
    %v1390 = vsel %vm64, %v1369, 0.0
    %v1391 = vsel %vm64, %v1370, 0.0
    %v1392 = vsel %vm64, %v1371, 0.0
    %v1393 = vsel %vm64, %v1372, 0.0
    %v1394 = vsel %vm64, %v1373, 0.0
    %v1395 = vsel %vm64, %v1374, 0.0
    %v1396 = vsel %vm64, %v1375, 0.0
    %v1397 = vsel %vm89, %v1376, 0.0
    %1398 = vadd.xlane.f32.xlu0 %v1397
    %v1399 = vpop.xlane.xlu0 %1398
    %v1400 = vsel %vm89, %v1377, 0.0
    %1401 = vadd.xlane.f32.xlu0 %v1400
    %v1402 = vpop.xlane.xlu0 %1401
    %v1403 = vsel %vm96, %v1378, 0.0
    %1404 = vadd.xlane.f32.xlu0 %v1403
    %v1405 = vpop.xlane.xlu0 %1404
    %v1406 = vsel %vm89, %v1379, 0.0
    %1407 = vadd.xlane.f32.xlu0 %v1406
    %v1408 = vpop.xlane.xlu0 %1407
    %v1409 = vsel %vm89, %v1380, 0.0
    %1410 = vadd.xlane.f32.xlu0 %v1409
    %v1411 = vpop.xlane.xlu0 %1410
    %v1412 = vsel %vm96, %v1381, 0.0
    %1413 = vadd.xlane.f32.xlu0 %v1412
    %v1414 = vpop.xlane.xlu0 %1413
    %v1415 = vsel %vm89, %v1382, 0.0
    %1416 = vadd.xlane.f32.xlu0 %v1415
    %v1417 = vpop.xlane.xlu0 %1416
    %v1418 = vsel %vm89, %v1383, 0.0
    %1419 = vadd.xlane.f32.xlu0 %v1418
    %v1420 = vpop.xlane.xlu0 %1419
    %v1421 = vsel %vm96, %v1384, 0.0
    %1422 = vadd.xlane.f32.xlu0 %v1421
    %v1423 = vpop.xlane.xlu0 %1422
    %v1424 = vsel %vm89, %v1385, 0.0
    %1425 = vadd.xlane.f32.xlu0 %v1424
    %v1426 = vpop.xlane.xlu0 %1425
    %v1427 = vsel %vm89, %v1386, 0.0
    %1428 = vadd.xlane.f32.xlu0 %v1427
    %v1429 = vpop.xlane.xlu0 %1428
    %v1430 = vsel %vm96, %v1387, 0.0
    %1431 = vadd.xlane.f32.xlu0 %v1430
    %v1432 = vpop.xlane.xlu0 %1431
    %v1433 = vsel %vm89, %v1388, 0.0
    %1434 = vadd.xlane.f32.xlu0 %v1433
    %v1435 = vpop.xlane.xlu0 %1434
    %v1436 = vsel %vm89, %v1389, 0.0
    %1437 = vadd.xlane.f32.xlu0 %v1436
    %v1438 = vpop.xlane.xlu0 %1437
    %v1439 = vsel %vm96, %v1390, 0.0
    %1440 = vadd.xlane.f32.xlu0 %v1439
    %v1441 = vpop.xlane.xlu0 %1440
    %v1442 = vsel %vm89, %v1391, 0.0
    %1443 = vadd.xlane.f32.xlu0 %v1442
    %v1444 = vpop.xlane.xlu0 %1443
    %v1445 = vsel %vm89, %v1392, 0.0
    %1446 = vadd.xlane.f32.xlu0 %v1445
    %v1447 = vpop.xlane.xlu0 %1446
    %v1448 = vsel %vm96, %v1393, 0.0
    %1449 = vadd.xlane.f32.xlu0 %v1448
    %v1450 = vpop.xlane.xlu0 %1449
    %v1451 = vsel %vm89, %v1394, 0.0
    %1452 = vadd.xlane.f32.xlu0 %v1451
    %v1453 = vpop.xlane.xlu0 %1452
    %v1454 = vsel %vm89, %v1395, 0.0
    %1455 = vadd.xlane.f32.xlu0 %v1454
    %v1456 = vpop.xlane.xlu0 %1455
    %v1457 = vsel %vm96, %v1396, 0.0
    %1458 = vadd.xlane.f32.xlu0 %v1457
    %v1459 = vpop.xlane.xlu0 %1458
    %v1481 = vlaneseq
    %v1482 = vshrl.u32 %v1481, 7
    %v1483 = vsub.s32 %v187, %v1482
    %v1484 = vrot.slane %v1399, %v1483
    %v1485 = vlaneseq
    %v1486 = vshrl.u32 %v1485, 7
    %v1487 = vsub.s32 %v192, %v1486
    %v1488 = vrot.slane %v1402, %v1487
    %v1489 = vsel %vm197, %v1488, %v1484
    %v1490 = vlaneseq
    %v1491 = vshrl.u32 %v1490, 7
    %v1492 = vsub.s32 %v199, %v1491
    %v1493 = vrot.slane %v1405, %v1492
    %v1494 = vsel %vm204, %v1493, %v1489
    %v1495 = vlaneseq
    %v1496 = vshrl.u32 %v1495, 7
    %v1497 = vsub.s32 %v187, %v1496
    %v1498 = vrot.slane %v1408, %v1497
    %v1499 = vlaneseq
    %v1500 = vshrl.u32 %v1499, 7
    %v1501 = vsub.s32 %v192, %v1500
    %v1502 = vrot.slane %v1411, %v1501
    %v1503 = vsel %vm197, %v1502, %v1498
    %v1504 = vlaneseq
    %v1505 = vshrl.u32 %v1504, 7
    %v1506 = vsub.s32 %v199, %v1505
    %v1507 = vrot.slane %v1414, %v1506
    %v1508 = vsel %vm204, %v1507, %v1503
    %v1509 = vlaneseq
    %v1510 = vshrl.u32 %v1509, 7
    %v1511 = vsub.s32 %v187, %v1510
    %v1512 = vrot.slane %v1417, %v1511
    %v1513 = vlaneseq
    %v1514 = vshrl.u32 %v1513, 7
    %v1515 = vsub.s32 %v192, %v1514
    %v1516 = vrot.slane %v1420, %v1515
    %v1517 = vsel %vm197, %v1516, %v1512
    %v1518 = vlaneseq
    %v1519 = vshrl.u32 %v1518, 7
    %v1520 = vsub.s32 %v199, %v1519
    %v1521 = vrot.slane %v1423, %v1520
    %v1522 = vsel %vm204, %v1521, %v1517
    %v1523 = vlaneseq
    %v1524 = vshrl.u32 %v1523, 7
    %v1525 = vsub.s32 %v187, %v1524
    %v1526 = vrot.slane %v1426, %v1525
    %v1527 = vlaneseq
    %v1528 = vshrl.u32 %v1527, 7
    %v1529 = vsub.s32 %v192, %v1528
    %v1530 = vrot.slane %v1429, %v1529
    %v1531 = vsel %vm197, %v1530, %v1526
    %v1532 = vlaneseq
    %v1533 = vshrl.u32 %v1532, 7
    %v1534 = vsub.s32 %v199, %v1533
    %v1535 = vrot.slane %v1432, %v1534
    %v1536 = vsel %vm204, %v1535, %v1531
    %v1537 = vlaneseq
    %v1538 = vshrl.u32 %v1537, 7
    %v1539 = vsub.s32 %v187, %v1538
    %v1540 = vrot.slane %v1435, %v1539
    %v1541 = vlaneseq
    %v1542 = vshrl.u32 %v1541, 7
    %v1543 = vsub.s32 %v192, %v1542
    %v1544 = vrot.slane %v1438, %v1543
    %v1545 = vsel %vm197, %v1544, %v1540
    %v1546 = vlaneseq
    %v1547 = vshrl.u32 %v1546, 7
    %v1548 = vsub.s32 %v199, %v1547
    %v1549 = vrot.slane %v1441, %v1548
    %v1550 = vsel %vm204, %v1549, %v1545
    %v1551 = vlaneseq
    %v1552 = vshrl.u32 %v1551, 7
    %v1553 = vsub.s32 %v187, %v1552
    %v1554 = vrot.slane %v1444, %v1553
    %v1555 = vlaneseq
    %v1556 = vshrl.u32 %v1555, 7
    %v1557 = vsub.s32 %v192, %v1556
    %v1558 = vrot.slane %v1447, %v1557
    %v1559 = vsel %vm197, %v1558, %v1554
    %v1560 = vlaneseq
    %v1561 = vshrl.u32 %v1560, 7
    %v1562 = vsub.s32 %v199, %v1561
    %v1563 = vrot.slane %v1450, %v1562
    %v1564 = vsel %vm204, %v1563, %v1559
    %v1565 = vlaneseq
    %v1566 = vshrl.u32 %v1565, 7
    %v1567 = vsub.s32 %v187, %v1566
    %v1568 = vrot.slane %v1453, %v1567
    %v1569 = vlaneseq
    %v1570 = vshrl.u32 %v1569, 7
    %v1571 = vsub.s32 %v192, %v1570
    %v1572 = vrot.slane %v1456, %v1571
    %v1573 = vsel %vm197, %v1572, %v1568
    %v1574 = vlaneseq
    %v1575 = vshrl.u32 %v1574, 7
    %v1576 = vsub.s32 %v199, %v1575
    %v1577 = vrot.slane %v1459, %v1576
    %v1578 = vsel %vm204, %v1577, %v1573
    %v1579 = vsel %vm304, %v1508, %v1494
    %v1580 = vsel %vm306, %v1522, %v1579
    %v1581 = vsel %vm308, %v1536, %v1580
    %v1582 = vsel %vm310, %v1550, %v1581
    %v1583 = vsel %vm312, %v1564, %v1582
    %v1584 = vsel %vm314, %v1578, %v1583
    %1586 = vst.msk [vmem:[%s1086 + $0x11] sm:$0x7f] %vm819, %v1584
    %s1587 = sld [smem:[#allocation3]]
    %v1588 = vstv %s1587
    %v1589 = vld [vmem:[#allocation2] sm:$0xff]
    %v1590 = vld [vmem:[#allocation2 + $0x8] sm:$0xff]
    %v1591 = vld [vmem:[#allocation2 + $0x10] sm:$0xff]
    %v1592 = vld [vmem:[#allocation2 + $0x18] sm:$0x1]
    %v1593 = vld [vmem:[#allocation2 + $0x20] sm:$0xff]
    %v1594 = vld [vmem:[#allocation2 + $0x28] sm:$0xff]
    %v1595 = vld [vmem:[#allocation2 + $0x30] sm:$0xff]
    %v1596 = vld [vmem:[#allocation2 + $0x38] sm:$0x1]
    %s1597 = sld [smem:[#allocation4]]
    %v1598 = vstv %s1597
    %v1599 = vmul.f32 %v1598, %v1589
    %v1600 = vmul.f32 %v1598, %v1590
    %v1601 = vmul.f32 %v1598, %v1591
    %v1602 = vmul.f32 %v1598, %v1593
    %v1603 = vmul.f32 %v1598, %v1594
    %v1604 = vmul.f32 %v1598, %v1595
    %v1605 = vadd.f32 %v1588, %v1599
    %v1606 = vadd.f32 %v1588, %v1600
    %v1607 = vadd.f32 %v1588, %v1601
    %v1608 = vadd.f32 %v1588, %v1602
    %v1609 = vadd.f32 %v1588, %v1603
    %v1610 = vadd.f32 %v1588, %v1604
    %s1611 = sld [smem:[#allocation4 + $0x3]]
    %v1612 = vstv %s1611
    %v1613 = vmul.f32 %v1612, %v1589
    %v1614 = vmul.f32 %v1612, %v1590
    %v1615 = vmul.f32 %v1612, %v1591
    %v1616 = vmul.f32 %v1612, %v1593
    %v1617 = vmul.f32 %v1612, %v1594
    %v1618 = vmul.f32 %v1612, %v1595
    %vm1625 = vcmask 1046528
    %v1626 = vrot.slane %v1613, 1
    %v1627 = vrot.slane %v1614, 1
    %v1628 = vsel %vm1625, %v1626, %v1627
    %v1629 = vrot.slane %v1615, 1
    %v1630 = vsel %vm1625, %v1627, %v1629
    %v1631 = vrot.slane %v1616, 1
    %v1632 = vrot.slane %v1617, 1
    %v1633 = vsel %vm1625, %v1631, %v1632
    %v1634 = vrot.slane %v1618, 1
    %v1635 = vsel %vm1625, %v1632, %v1634
    %v1642 = vadd.f32 %v1605, %v1628
    %v1643 = vadd.f32 %v1606, %v1630
    %v1644 = vadd.f32 %v1607, %v1629
    %v1645 = vadd.f32 %v1608, %v1633
    %v1646 = vadd.f32 %v1609, %v1635
    %v1647 = vadd.f32 %v1610, %v1634
    %s1648 = sld [smem:[#allocation4 + $0x6]]
    %v1649 = vstv %s1648
    %v1650 = vmul.f32 %v1649, %v1589
    %v1651 = vmul.f32 %v1649, %v1590
    %v1652 = vmul.f32 %v1649, %v1591
    %v1653 = vmul.f32 %v1649, %v1592
    %v1654 = vmul.f32 %v1649, %v1593
    %v1655 = vmul.f32 %v1649, %v1594
    %v1656 = vmul.f32 %v1649, %v1595
    %v1657 = vmul.f32 %v1649, %v1596
    %vm1666 = vcmask 1045504
    %v1667 = vrot.slane %v1650, 2
    %v1668 = vrot.slane %v1651, 2
    %v1669 = vsel %vm1666, %v1667, %v1668
    %v1670 = vrot.slane %v1652, 2
    %v1671 = vsel %vm1666, %v1668, %v1670
    %v1672 = vrot.slane %v1653, 2
    %v1673 = vsel %vm1666, %v1670, %v1672
    %v1674 = vrot.slane %v1654, 2
    %v1675 = vrot.slane %v1655, 2
    %v1676 = vsel %vm1666, %v1674, %v1675
    %v1677 = vrot.slane %v1656, 2
    %v1678 = vsel %vm1666, %v1675, %v1677
    %v1679 = vrot.slane %v1657, 2
    %v1680 = vsel %vm1666, %v1677, %v1679
    %v1687 = vadd.f32 %v1642, %v1669
    %v1688 = vadd.f32 %v1643, %v1671
    %v1689 = vadd.f32 %v1644, %v1673
    %v1690 = vadd.f32 %v1645, %v1676
    %v1691 = vadd.f32 %v1646, %v1678
    %v1692 = vadd.f32 %v1647, %v1680
    %s1693 = sld [smem:[#allocation4 + $0x1]]
    %v1694 = vstv %s1693
    %v1695 = vmul.f32 %v1694, %v1589
    %v1696 = vmul.f32 %v1694, %v1590
    %v1697 = vmul.f32 %v1694, %v1591
    %v1698 = vmul.f32 %v1694, %v1593
    %v1699 = vmul.f32 %v1694, %v1594
    %v1700 = vmul.f32 %v1694, %v1595
    %1707 = vrot.lane.b32.xlu0 %v1695, 127
    %v1708 = vpop.permute.xlu0 %1707
    %1709 = vrot.lane.b32.xlu0 %v1696, 127
    %v1710 = vpop.permute.xlu0 %1709
    %1711 = vrot.lane.b32.xlu0 %v1697, 127
    %v1712 = vpop.permute.xlu0 %1711
    %1713 = vrot.lane.b32.xlu0 %v1698, 127
    %v1714 = vpop.permute.xlu0 %1713
    %1715 = vrot.lane.b32.xlu0 %v1699, 127
    %v1716 = vpop.permute.xlu0 %1715
    %1717 = vrot.lane.b32.xlu0 %v1700, 127
    %v1718 = vpop.permute.xlu0 %1717
    %v1725 = vadd.f32 %v1687, %v1708
    %v1726 = vadd.f32 %v1688, %v1710
    %v1727 = vadd.f32 %v1689, %v1712
    %v1728 = vadd.f32 %v1690, %v1714
    %v1729 = vadd.f32 %v1691, %v1716
    %v1730 = vadd.f32 %v1692, %v1718
    %s1731 = sld [smem:[#allocation4 + $0x4]]
    %v1732 = vstv %s1731
    %v1733 = vmul.f32 %v1732, %v1589
    %v1734 = vmul.f32 %v1732, %v1590
    %v1735 = vmul.f32 %v1732, %v1591
    %v1736 = vmul.f32 %v1732, %v1593
    %v1737 = vmul.f32 %v1732, %v1594
    %v1738 = vmul.f32 %v1732, %v1595
    %v1745 = vrot.slane %v1733, 1
    %v1746 = vrot.slane %v1734, 1
    %v1747 = vsel %vm1625, %v1745, %v1746
    %v1748 = vrot.slane %v1735, 1
    %v1749 = vsel %vm1625, %v1746, %v1748
    %v1750 = vrot.slane %v1736, 1
    %v1751 = vrot.slane %v1737, 1
    %v1752 = vsel %vm1625, %v1750, %v1751
    %v1753 = vrot.slane %v1738, 1
    %v1754 = vsel %vm1625, %v1751, %v1753
    %1755 = vrot.lane.b32.xlu0 %v1747, 127
    %v1756 = vpop.permute.xlu0 %1755
    %1757 = vrot.lane.b32.xlu0 %v1749, 127
    %v1758 = vpop.permute.xlu0 %1757
    %1759 = vrot.lane.b32.xlu0 %v1748, 127
    %v1760 = vpop.permute.xlu0 %1759
    %1761 = vrot.lane.b32.xlu0 %v1752, 127
    %v1762 = vpop.permute.xlu0 %1761
    %1763 = vrot.lane.b32.xlu0 %v1754, 127
    %v1764 = vpop.permute.xlu0 %1763
    %1765 = vrot.lane.b32.xlu0 %v1753, 127
    %v1766 = vpop.permute.xlu0 %1765
    %v1773 = vadd.f32 %v1725, %v1756
    %v1774 = vadd.f32 %v1726, %v1758
    %v1775 = vadd.f32 %v1727, %v1760
    %v1776 = vadd.f32 %v1728, %v1762
    %v1777 = vadd.f32 %v1729, %v1764
    %v1778 = vadd.f32 %v1730, %v1766
    %s1779 = sld [smem:[#allocation4 + $0x7]]
    %v1780 = vstv %s1779
    %v1781 = vmul.f32 %v1780, %v1589
    %v1782 = vmul.f32 %v1780, %v1590
    %v1783 = vmul.f32 %v1780, %v1591
    %v1784 = vmul.f32 %v1780, %v1592
    %v1785 = vmul.f32 %v1780, %v1593
    %v1786 = vmul.f32 %v1780, %v1594
    %v1787 = vmul.f32 %v1780, %v1595
    %v1788 = vmul.f32 %v1780, %v1596
    %v1797 = vrot.slane %v1781, 2
    %v1798 = vrot.slane %v1782, 2
    %v1799 = vsel %vm1666, %v1797, %v1798
    %v1800 = vrot.slane %v1783, 2
    %v1801 = vsel %vm1666, %v1798, %v1800
    %v1802 = vrot.slane %v1784, 2
    %v1803 = vsel %vm1666, %v1800, %v1802
    %v1804 = vrot.slane %v1785, 2
    %v1805 = vrot.slane %v1786, 2
    %v1806 = vsel %vm1666, %v1804, %v1805
    %v1807 = vrot.slane %v1787, 2
    %v1808 = vsel %vm1666, %v1805, %v1807
    %v1809 = vrot.slane %v1788, 2
    %v1810 = vsel %vm1666, %v1807, %v1809
    %1811 = vrot.lane.b32.xlu0 %v1799, 127
    %v1812 = vpop.permute.xlu0 %1811
    %1813 = vrot.lane.b32.xlu0 %v1801, 127
    %v1814 = vpop.permute.xlu0 %1813
    %1815 = vrot.lane.b32.xlu0 %v1803, 127
    %v1816 = vpop.permute.xlu0 %1815
    %1817 = vrot.lane.b32.xlu0 %v1806, 127
    %v1818 = vpop.permute.xlu0 %1817
    %1819 = vrot.lane.b32.xlu0 %v1808, 127
    %v1820 = vpop.permute.xlu0 %1819
    %1821 = vrot.lane.b32.xlu0 %v1810, 127
    %v1822 = vpop.permute.xlu0 %1821
    %v1829 = vadd.f32 %v1773, %v1812
    %v1830 = vadd.f32 %v1774, %v1814
    %v1831 = vadd.f32 %v1775, %v1816
    %v1832 = vadd.f32 %v1776, %v1818
    %v1833 = vadd.f32 %v1777, %v1820
    %v1834 = vadd.f32 %v1778, %v1822
    %s1835 = sld [smem:[#allocation4 + $0x2]]
    %v1836 = vstv %s1835
    %v1837 = vmul.f32 %v1836, %v1589
    %v1838 = vmul.f32 %v1836, %v1590
    %v1839 = vmul.f32 %v1836, %v1591
    %v1840 = vmul.f32 %v1836, %v1593
    %v1841 = vmul.f32 %v1836, %v1594
    %v1842 = vmul.f32 %v1836, %v1595
    %1849 = vrot.lane.b32.xlu0 %v1837, 126
    %v1850 = vpop.permute.xlu0 %1849
    %1851 = vrot.lane.b32.xlu0 %v1838, 126
    %v1852 = vpop.permute.xlu0 %1851
    %1853 = vrot.lane.b32.xlu0 %v1839, 126
    %v1854 = vpop.permute.xlu0 %1853
    %1855 = vrot.lane.b32.xlu0 %v1840, 126
    %v1856 = vpop.permute.xlu0 %1855
    %1857 = vrot.lane.b32.xlu0 %v1841, 126
    %v1858 = vpop.permute.xlu0 %1857
    %1859 = vrot.lane.b32.xlu0 %v1842, 126
    %v1860 = vpop.permute.xlu0 %1859
    %v1867 = vadd.f32 %v1829, %v1850
    %v1868 = vadd.f32 %v1830, %v1852
    %v1869 = vadd.f32 %v1831, %v1854
    %v1870 = vadd.f32 %v1832, %v1856
    %v1871 = vadd.f32 %v1833, %v1858
    %v1872 = vadd.f32 %v1834, %v1860
    %s1873 = sld [smem:[#allocation4 + $0x5]]
    %v1874 = vstv %s1873
    %v1875 = vmul.f32 %v1874, %v1589
    %v1876 = vmul.f32 %v1874, %v1590
    %v1877 = vmul.f32 %v1874, %v1591
    %v1878 = vmul.f32 %v1874, %v1593
    %v1879 = vmul.f32 %v1874, %v1594
    %v1880 = vmul.f32 %v1874, %v1595
    %v1887 = vrot.slane %v1875, 1
    %v1888 = vrot.slane %v1876, 1
    %v1889 = vsel %vm1625, %v1887, %v1888
    %v1890 = vrot.slane %v1877, 1
    %v1891 = vsel %vm1625, %v1888, %v1890
    %v1892 = vrot.slane %v1878, 1
    %v1893 = vrot.slane %v1879, 1
    %v1894 = vsel %vm1625, %v1892, %v1893
    %v1895 = vrot.slane %v1880, 1
    %v1896 = vsel %vm1625, %v1893, %v1895
    %1897 = vrot.lane.b32.xlu0 %v1889, 126
    %v1898 = vpop.permute.xlu0 %1897
    %1899 = vrot.lane.b32.xlu0 %v1891, 126
    %v1900 = vpop.permute.xlu0 %1899
    %1901 = vrot.lane.b32.xlu0 %v1890, 126
    %v1902 = vpop.permute.xlu0 %1901
    %1903 = vrot.lane.b32.xlu0 %v1894, 126
    %v1904 = vpop.permute.xlu0 %1903
    %1905 = vrot.lane.b32.xlu0 %v1896, 126
    %v1906 = vpop.permute.xlu0 %1905
    %1907 = vrot.lane.b32.xlu0 %v1895, 126
    %v1908 = vpop.permute.xlu0 %1907
    %v1915 = vadd.f32 %v1867, %v1898
    %v1916 = vadd.f32 %v1868, %v1900
    %v1917 = vadd.f32 %v1869, %v1902
    %v1918 = vadd.f32 %v1870, %v1904
    %v1919 = vadd.f32 %v1871, %v1906
    %v1920 = vadd.f32 %v1872, %v1908
    %s1921 = sld [smem:[#allocation4 + $0x8]]
    %v1922 = vstv %s1921
    %v1923 = vmul.f32 %v1922, %v1589
    %v1924 = vmul.f32 %v1922, %v1590
    %v1925 = vmul.f32 %v1922, %v1591
    %v1926 = vmul.f32 %v1922, %v1592
    %v1927 = vmul.f32 %v1922, %v1593
    %v1928 = vmul.f32 %v1922, %v1594
    %v1929 = vmul.f32 %v1922, %v1595
    %v1930 = vmul.f32 %v1922, %v1596
    %v1939 = vrot.slane %v1923, 2
    %v1940 = vrot.slane %v1924, 2
    %v1941 = vsel %vm1666, %v1939, %v1940
    %v1942 = vrot.slane %v1925, 2
    %v1943 = vsel %vm1666, %v1940, %v1942
    %v1944 = vrot.slane %v1926, 2
    %v1945 = vsel %vm1666, %v1942, %v1944
    %v1946 = vrot.slane %v1927, 2
    %v1947 = vrot.slane %v1928, 2
    %v1948 = vsel %vm1666, %v1946, %v1947
    %v1949 = vrot.slane %v1929, 2
    %v1950 = vsel %vm1666, %v1947, %v1949
    %v1951 = vrot.slane %v1930, 2
    %v1952 = vsel %vm1666, %v1949, %v1951
    %1953 = vrot.lane.b32.xlu0 %v1941, 126
    %v1954 = vpop.permute.xlu0 %1953
    %1955 = vrot.lane.b32.xlu0 %v1943, 126
    %v1956 = vpop.permute.xlu0 %1955
    %1957 = vrot.lane.b32.xlu0 %v1945, 126
    %v1958 = vpop.permute.xlu0 %1957
    %1959 = vrot.lane.b32.xlu0 %v1948, 126
    %v1960 = vpop.permute.xlu0 %1959
    %1961 = vrot.lane.b32.xlu0 %v1950, 126
    %v1962 = vpop.permute.xlu0 %1961
    %1963 = vrot.lane.b32.xlu0 %v1952, 126
    %v1964 = vpop.permute.xlu0 %1963
    %v1971 = vadd.f32 %v1915, %v1954
    %v1972 = vadd.f32 %v1916, %v1956
    %v1973 = vadd.f32 %v1917, %v1958
    %v1974 = vadd.f32 %v1918, %v1960
    %v1975 = vadd.f32 %v1919, %v1962
    %v1976 = vadd.f32 %v1920, %v1964
    %vm1977 = vcmask 187392
    %1978 = vst.msk [vmem:[%s3] sm:$0xff] %vm1977, %v1971
    %1979 = vst.msk [vmem:[%s3 + $0x8] sm:$0xff] %vm1977, %v1972
    %vm1980 = vcmask 186368
    %1981 = vst.msk [vmem:[%s3 + $0x10] sm:$0x7f] %vm1980, %v1973
    %1982 = vst.msk [vmem:[%s3 + $0x18] sm:$0xff] %vm1977, %v1974
    %1983 = vst.msk [vmem:[%s3 + $0x20] sm:$0xff] %vm1977, %v1975
    %1984 = vst.msk [vmem:[%s3 + $0x28] sm:$0x7f] %vm1980, %v1976
    // Predicated region
    $region18: #{tpu_custom_call.1} parent=1 // pred_check
      _
    $region19: #{tpu_custom_call.1} parent=1 // pred_check_branch
      %1986 = sbr.rel (0) target = $region21
    $region20: #{tpu_custom_call.1} parent=1 // pred_region
      _
    $region21: #{tpu_custom_call.1} parent=1 // pred_fallthru
      _
    // Predicated region
    $region22: #{tpu_custom_call.1} parent=1 // pred_check
      _
    $region23: #{tpu_custom_call.1} parent=1 // pred_check_branch
      %1988 = sbr.rel (0) target = $region25
    $region24: #{tpu_custom_call.1} parent=1 // pred_region
      _
    $region25: #{tpu_custom_call.1} parent=1 // pred_fallthru
      _
    %1989 = vsyncpa [#allocation5], 1

</llo_original>
